<compile_context>
chip_gen: v7x
topology: tpu7x:2x2x1
jax: 0.10.0
libtpu: 0.0.40
codegen_flags: <defaults>
</compile_context>

<pallas_src>
import functools

import jax
import jax.numpy as jnp
from jax.experimental import pallas as pl
from jax.experimental.pallas import tpu as pltpu

_LANE = 128     # vreg lane width
_SUBLANE = 8    # vreg sublane height (f32)


def _round_up(x, m):
    return ((x + m - 1) // m) * m


def _attention_lstm_kernel(support_ref, q_ref, w_ih_t_ref, w_hh_t_ref, bias_ref,
                           out_ref, x_gates_ref, h_hat_ref, c_ref,
                           *, unrolling_steps, dpad):
    """Attention readout + LSTMCell unrolling for one block of query rows."""
    # Loop-invariant input projection (queries @ W_ih^T + bias, already gate-
    # scaled).  Computed once per block and parked in VMEM scratch -- too large
    # for the vreg file at bigger row tiles -- then re-read each step.
    x_gates_ref[...] = (
        jnp.dot(q_ref[...], w_ih_t_ref[...], preferred_element_type=jnp.float32)
        + bias_ref[...])

    h_hat_ref[...] = jnp.zeros_like(h_hat_ref)
    c_ref[...] = jnp.zeros_like(c_ref)

    # unrolling_steps is small (3 here); a static unroll is fine.  For 10+ steps
    # switch to lax.fori_loop with (h_hat, c) in scratch as the carry.
    for _ in range(unrolling_steps):
        h = h_hat_ref[...] + q_ref[...]                                  # (tm, D)

        # attentions = softmax(h @ support^T, dim=1).  Contract the last dims
        # directly (MXU trans_b) -- no separately materialized support^T operand.
        att = jax.lax.dot_general(
            h, support_ref[...], (((1,), (1,)), ((), ())),
            preferred_element_type=jnp.float32)                          # (tm, S)
        att = jnp.exp(att - jnp.max(att, axis=1, keepdims=True))
        att = att / jnp.sum(att, axis=1, keepdims=True)                  # exact recip

        readout = jnp.dot(att, support_ref[...],
                          preferred_element_type=jnp.float32)            # (tm, D)

        # LSTMCell(queries, (h + readout, c)); PyTorch gate order i, f, g, o.
        # Weights/bias were pre-scaled per gate (0.5 for i/f/o, 1.0 for g), so a
        # single full-width tanh implements all four nonlinearities:
        #   sigmoid(x) = 0.5 * (tanh(x/2) + 1).
        hx = h + readout
        gates = x_gates_ref[...] + jnp.dot(hx, w_hh_t_ref[...],
                                           preferred_element_type=jnp.float32)
        t = jnp.tanh(gates)                                              # one EUP pass
        i_g = 0.5 * (t[:, 0 * dpad:1 * dpad] + 1.0)
        f_g = 0.5 * (t[:, 1 * dpad:2 * dpad] + 1.0)
        g_g = t[:, 2 * dpad:3 * dpad]
        o_g = 0.5 * (t[:, 3 * dpad:4 * dpad] + 1.0)
        # Padded lanes: zero weights/bias -> t=0 -> i=f=o=0.5, g=0 -> c, h_hat
        # remain exactly 0 there.
        c_ref[...] = f_g * c_ref[...] + i_g * g_g
        h_hat_ref[...] = o_g * jnp.tanh(c_ref[...])

    out_ref[...] = (h_hat_ref[...] + q_ref[...]).astype(out_ref.dtype)


def prepare_attention_lstm_weights(w_ih, w_hh, b_ih, b_hh):
    """One-time weight prep (call once, outside the per-forward hot path).

    Pads to (8,128)-aligned lane-dense tiles, transposes to [in, 4*out] layout,
    and folds the per-gate sigmoid-as-tanh scale (0.5 for i/f/o, 1.0 for g) into
    weights and bias.
    """
    four_size, size = w_ih.shape
    assert four_size == 4 * size and w_hh.shape == (4 * size, size)
    f32 = jnp.float32
    dpad = _round_up(max(size, _LANE), _LANE)
    gate_scale = jnp.array([0.5, 0.5, 1.0, 0.5], f32)     # PyTorch order i, f, g, o

    def pack(w):   # (4*size, size) -> (dpad, 4*dpad), scaled, transposed, padded
        w_g = w.astype(f32).reshape(4, size, size) * gate_scale[:, None, None]
        w_t = jnp.transpose(w_g, (2, 0, 1))                 # (in, gate, out)
        w_t = jnp.pad(w_t, ((0, dpad - size), (0, 0), (0, dpad - size)))
        return w_t.reshape(dpad, 4 * dpad)

    w_ih_t_p = pack(w_ih)
    w_hh_t_p = pack(w_hh)
    b = (b_ih + b_hh).astype(f32).reshape(4, size) * gate_scale[:, None]
    bias_p = jnp.pad(b, ((0, 0), (0, dpad - size))).reshape(1, 4 * dpad)
    return w_ih_t_p, w_hh_t_p, bias_p


@functools.partial(jax.jit, static_argnames=("unrolling_steps", "block_m"))
def attention_lstm_forward(support, queries, w_ih_t_p, w_hh_t_p, bias_p,
                           unrolling_steps, block_m=128):
    """Per-call wrapper: pad activations, launch one gridded pallas_call.

    block_m: query rows per grid block.  128 matches the v5e MXU (4x128^2); use
    256 on v6e/v7x when running large batched workloads to fill the 2x256^2 MXU.
    """
    n_support, size = support.shape
    batch, size_q = queries.shape
    if size != size_q:
        raise ValueError("Support and query set have different embedding dimension!")

    f32 = jnp.float32
    dpad = w_ih_t_p.shape[0]

    # Query-batch tiling: one grid step per block of tm rows.  The recurrence is
    # per-row independent, so this is exact.
    if batch > block_m:
        tm = block_m
        bpad = _round_up(batch, tm)
    else:
        tm = _round_up(max(batch, _SUBLANE), _SUBLANE)
        bpad = tm
    gm = bpad // tm

    support_p = jnp.pad(support.astype(f32), ((0, 0), (0, dpad - size)))
    queries_p = jnp.pad(queries.astype(f32),
                        ((0, bpad - batch), (0, dpad - size)))

    kernel = functools.partial(_attention_lstm_kernel,
                               unrolling_steps=unrolling_steps, dpad=dpad)

    steps = unrolling_steps
    flops_block = (2 * tm * dpad * 4 * dpad * (steps + 1)
                   + steps * 4 * tm * n_support * dpad)
    trans_block = steps * (tm * n_support + 5 * tm * dpad)
    bytes_accessed = 4 * (support_p.size + queries_p.size + w_ih_t_p.size
                          + w_hh_t_p.size + bias_p.size + bpad * dpad)

    out_p = pl.pallas_call(
        kernel,
        out_shape=jax.ShapeDtypeStruct((bpad, dpad), f32),
        grid=(gm,),
        in_specs=[
            pl.BlockSpec((n_support, dpad), lambda i: (0, 0)),   # support  (resident)
            pl.BlockSpec((tm, dpad), lambda i: (i, 0)),          # queries  (advances)
            pl.BlockSpec((dpad, 4 * dpad), lambda i: (0, 0)),    # W_ih^T   (resident)
            pl.BlockSpec((dpad, 4 * dpad), lambda i: (0, 0)),    # W_hh^T   (resident)
            pl.BlockSpec((1, 4 * dpad), lambda i: (0, 0)),       # bias     (resident)
        ],
        out_specs=pl.BlockSpec((tm, dpad), lambda i: (i, 0)),
        scratch_shapes=[
            pltpu.VMEM((tm, 4 * dpad), f32),   # x_gates (loop-invariant input proj)
            pltpu.VMEM((tm, dpad), f32),       # h_hat carry
            pltpu.VMEM((tm, dpad), f32),       # c carry
        ],
        compiler_params=pltpu.CompilerParams(
            dimension_semantics=("parallel",)),   # v7x: shard blocks over 2 TCs
        cost_estimate=pl.CostEstimate(
            flops=gm * flops_block,
            transcendentals=gm * trans_block,
            bytes_accessed=int(bytes_accessed)),
    )(support_p, queries_p, w_ih_t_p, w_hh_t_p, bias_p)

    return out_p[:batch, :size]


def _reference_forward(support, queries, w_ih, w_hh, b_ih, b_hh, unrolling_steps):
    """Pure-JAX reference mirroring the PyTorch module, for verification."""
    q = queries.astype(jnp.float32)
    s = support.astype(jnp.float32)
    h_hat = jnp.zeros_like(q)
    c = jnp.zeros_like(q)
    size = q.shape[1]
    for _ in range(unrolling_steps):
        h = h_hat + q
        att = jax.nn.softmax(h @ s.T, axis=1)
        readout = att @ s
        hx = h + readout
        gates = q @ w_ih.T + b_ih + hx @ w_hh.T + b_hh
        i_g = jax.nn.sigmoid(gates[:, 0 * size:1 * size])
        f_g = jax.nn.sigmoid(gates[:, 1 * size:2 * size])
        g_g = jnp.tanh(gates[:, 2 * size:3 * size])
        o_g = jax.nn.sigmoid(gates[:, 3 * size:4 * size])
        c = f_g * c + i_g * g_g
        h_hat = o_g * jnp.tanh(c)
    return h_hat + q


if __name__ == "__main__":
    # Small shapes implied by the module: queries (batch, size), support (n_support, size)
    batch = 2
    n_support = 8
    size = 32
    unrolling_steps = 3

    key = jax.random.PRNGKey(0)
    k_sup, k_q, k_wih, k_whh, k_bih, k_bhh, k_big = jax.random.split(key, 7)

    support = jax.random.normal(k_sup, (n_support, size), dtype=jnp.float32)
    queries = jax.random.normal(k_q, (batch, size), dtype=jnp.float32)

    # Deterministic LSTMCell parameters (PyTorch shapes: W_ih/W_hh (4H, H), b (4H,))
    bound = 1.0 / (size ** 0.5)
    w_ih = jax.random.uniform(k_wih, (4 * size, size), jnp.float32, -bound, bound)
    w_hh = jax.random.uniform(k_whh, (4 * size, size), jnp.float32, -bound, bound)
    b_ih = jax.random.uniform(k_bih, (4 * size,), jnp.float32, -bound, bound)
    b_hh = jax.random.uniform(k_bhh, (4 * size,), jnp.float32, -bound, bound)

    # One-time weight prep, hoisted out of the per-call hot path.
    w_ih_t_p, w_hh_t_p, bias_p = prepare_attention_lstm_weights(
        w_ih, w_hh, b_ih, b_hh)

    # --- small-batch (single grid block) check, shapes matching the module ---
    out = attention_lstm_forward(support, queries, w_ih_t_p, w_hh_t_p, bias_p,
                                 unrolling_steps=unrolling_steps)
    out = jax.block_until_ready(out)
    ref = _reference_forward(support, queries, w_ih, w_hh, b_ih, b_hh,
                             unrolling_steps)
    assert out.shape == (batch, size)
    # Exact softmax reciprocal restored (tolerance tightened from 2e-3); a small
    # margin is kept for MXU f32 pass vs. XLA matmul rounding differences.
    assert jnp.allclose(out, ref, atol=1e-4, rtol=1e-4), \
        "mismatch vs reference (small batch)"

    # --- multi-block check: exercises the grid (resident weights, advancing
    # query/output blocks) that amortizes the per-call launch/DMA cost ---
    big_batch = 300
    queries_big = jax.random.normal(k_big, (big_batch, size), dtype=jnp.float32)
    out_big = attention_lstm_forward(support, queries_big, w_ih_t_p, w_hh_t_p,
                                     bias_p, unrolling_steps=unrolling_steps)
    out_big = jax.block_until_ready(out_big)
    ref_big = _reference_forward(support, queries_big, w_ih, w_hh, b_ih, b_hh,
                                 unrolling_steps)
    assert out_big.shape == (big_batch, size)
    assert jnp.allclose(out_big, ref_big, atol=1e-4, rtol=1e-4), \
        "mismatch vs reference (multi-block)"

    print("KERNEL_OK")
</pallas_src>

<mosaic_0001>
module attributes {stable_mosaic.version = 11 : i64} {
  func.func @_attention_lstm_kernel(%arg0: i32, %arg1: memref<8x128xf32, #tpu.memory_space<vmem>>, %arg2: memref<8x128xf32, #tpu.memory_space<vmem>>, %arg3: memref<128x512xf32, #tpu.memory_space<vmem>>, %arg4: memref<128x512xf32, #tpu.memory_space<vmem>>, %arg5: memref<1x512xf32, #tpu.memory_space<vmem>>, %arg6: memref<8x128xf32, #tpu.memory_space<vmem>>, %arg7: memref<8x512xf32, #tpu.memory_space<vmem>>, %arg8: memref<8x128xf32, #tpu.memory_space<vmem>>, %arg9: memref<8x128xf32, #tpu.memory_space<vmem>>) attributes {dimension_semantics = [#tpu.dimension_semantics<parallel>], iteration_bounds = array<i64: 1>, scalar_prefetch = 0 : i64, scratch_operands = 3 : i64, tpu.core_type = #tpu.core_type<tc>, window_params = [{pipeline_mode = #tpu.pipeline_mode<synchronous>, transform_indices = @transform_0, window_bounds = array<i64: 8, 128>}, {transform_indices = @transform_1, window_bounds = array<i64: 8, 128>}, {pipeline_mode = #tpu.pipeline_mode<synchronous>, transform_indices = @transform_2, window_bounds = array<i64: 128, 512>}, {pipeline_mode = #tpu.pipeline_mode<synchronous>, transform_indices = @transform_3, window_bounds = array<i64: 128, 512>}, {pipeline_mode = #tpu.pipeline_mode<synchronous>, transform_indices = @transform_4, window_bounds = array<i64: 1, 512>}, {transform_indices = @transform_5, window_bounds = array<i64: 8, 128>}]} {
    %c0 = arith.constant 0 : index
    %c0_0 = arith.constant 0 : index
    %0 = vector.load %arg2[%c0, %c0_0] : memref<8x128xf32, #tpu.memory_space<vmem>>, vector<8x128xf32>
    %c0_1 = arith.constant 0 : index
    %c0_2 = arith.constant 0 : index
    %1 = vector.load %arg3[%c0_1, %c0_2] : memref<128x512xf32, #tpu.memory_space<vmem>>, vector<128x512xf32>
    %cst = arith.constant dense<0.000000e+00> : vector<8x512xf32>
    %2 = tpu.matmul %0, %1, %cst {dimension_numbers = #tpu.dot_dimension_numbers<[1], [0], [0], [1], [0, 0, 1, 1], [], []>} : vector<8x128xf32>, vector<128x512xf32>, vector<8x512xf32> -> vector<8x512xf32>
    %c0_3 = arith.constant 0 : index
    %c0_4 = arith.constant 0 : index
    %3 = vector.load %arg5[%c0_3, %c0_4] : memref<1x512xf32, #tpu.memory_space<vmem>>, vector<1x512xf32>
    %4 = vector.broadcast %3 : vector<1x512xf32> to vector<8x512xf32>
    %5 = arith.addf %2, %4 : vector<8x512xf32>
    %c0_5 = arith.constant 0 : index
    %c0_6 = arith.constant 0 : index
    %6 = vector.load %arg7[%c0_5, %c0_6] : memref<8x512xf32, #tpu.memory_space<vmem>>, vector<8x512xf32>
    tpu.vector_store %arg7[%c0_5, %c0_6], %5 {strides = array<i32>} : memref<8x512xf32, #tpu.memory_space<vmem>>, vector<8x512xf32>,
    %cst_7 = arith.constant 0.000000e+00 : f32
    %7 = vector.broadcast %cst_7 : f32 to vector<8x128xf32>
    %c0_8 = arith.constant 0 : index
    %c0_9 = arith.constant 0 : index
    %8 = vector.load %arg8[%c0_8, %c0_9] : memref<8x128xf32, #tpu.memory_space<vmem>>, vector<8x128xf32>
    tpu.vector_store %arg8[%c0_8, %c0_9], %7 {strides = array<i32>} : memref<8x128xf32, #tpu.memory_space<vmem>>, vector<8x128xf32>,
    %cst_10 = arith.constant 0.000000e+00 : f32
    %9 = vector.broadcast %cst_10 : f32 to vector<8x128xf32>
    %c0_11 = arith.constant 0 : index
    %c0_12 = arith.constant 0 : index
    %10 = vector.load %arg9[%c0_11, %c0_12] : memref<8x128xf32, #tpu.memory_space<vmem>>, vector<8x128xf32>
    tpu.vector_store %arg9[%c0_11, %c0_12], %9 {strides = array<i32>} : memref<8x128xf32, #tpu.memory_space<vmem>>, vector<8x128xf32>,
    %c0_13 = arith.constant 0 : index
    %c0_14 = arith.constant 0 : index
    %11 = vector.load %arg8[%c0_13, %c0_14] : memref<8x128xf32, #tpu.memory_space<vmem>>, vector<8x128xf32>
    %c0_15 = arith.constant 0 : index
    %c0_16 = arith.constant 0 : index
    %12 = vector.load %arg2[%c0_15, %c0_16] : memref<8x128xf32, #tpu.memory_space<vmem>>, vector<8x128xf32>
    %13 = arith.addf %11, %12 : vector<8x128xf32>
    %c0_17 = arith.constant 0 : index
    %c0_18 = arith.constant 0 : index
    %14 = vector.load %arg1[%c0_17, %c0_18] : memref<8x128xf32, #tpu.memory_space<vmem>>, vector<8x128xf32>
    %cst_19 = arith.constant dense<0.000000e+00> : vector<8x8xf32>
    %15 = tpu.matmul %13, %14, %cst_19 {dimension_numbers = #tpu.dot_dimension_numbers<[1], [1], [0], [0], [0, 0, 1, 0], [], []>} : vector<8x128xf32>, vector<8x128xf32>, vector<8x8xf32> -> vector<8x8xf32>
    %cst_20 = arith.constant dense<0xFF800000> : vector<8xf32>
    %16 = vector.multi_reduction <maximumf>, %15, %cst_20 [1] : vector<8x8xf32> to vector<8xf32>
    %17 = vector.shape_cast %16 : vector<8xf32> to vector<8x1xf32>
    %18 = vector.broadcast %17 : vector<8x1xf32> to vector<8x8xf32>
    %19 = arith.subf %15, %18 : vector<8x8xf32>
    %20 = math.exp %19 : vector<8x8xf32>
    %cst_21 = arith.constant dense<0.000000e+00> : vector<8xf32>
    %21 = vector.multi_reduction <add>, %20, %cst_21 [1] : vector<8x8xf32> to vector<8xf32>
    %22 = vector.shape_cast %21 : vector<8xf32> to vector<8x1xf32>
    %23 = vector.broadcast %22 : vector<8x1xf32> to vector<8x8xf32>
    %24 = arith.divf %20, %23 : vector<8x8xf32>
    %c0_22 = arith.constant 0 : index
    %c0_23 = arith.constant 0 : index
    %25 = vector.load %arg1[%c0_22, %c0_23] : memref<8x128xf32, #tpu.memory_space<vmem>>, vector<8x128xf32>
    %cst_24 = arith.constant dense<0.000000e+00> : vector<8x128xf32>
    %26 = tpu.matmul %24, %25, %cst_24 {dimension_numbers = #tpu.dot_dimension_numbers<[1], [0], [0], [1], [0, 0, 1, 1], [], []>} : vector<8x8xf32>, vector<8x128xf32>, vector<8x128xf32> -> vector<8x128xf32>
    %27 = arith.addf %13, %26 : vector<8x128xf32>
    %c0_25 = arith.constant 0 : index
    %c0_26 = arith.constant 0 : index
    %28 = vector.load %arg7[%c0_25, %c0_26] : memref<8x512xf32, #tpu.memory_space<vmem>>, vector<8x512xf32>
    %c0_27 = arith.constant 0 : index
    %c0_28 = arith.constant 0 : index
    %29 = vector.load %arg4[%c0_27, %c0_28] : memref<128x512xf32, #tpu.memory_space<vmem>>, vector<128x512xf32>
    %cst_29 = arith.constant dense<0.000000e+00> : vector<8x512xf32>
    %30 = tpu.matmul %27, %29, %cst_29 {dimension_numbers = #tpu.dot_dimension_numbers<[1], [0], [0], [1], [0, 0, 1, 1], [], []>} : vector<8x128xf32>, vector<128x512xf32>, vector<8x512xf32> -> vector<8x512xf32>
    %31 = arith.addf %28, %30 : vector<8x512xf32>
    %32 = math.tanh %31 : vector<8x512xf32>
    %33 = vector.extract_strided_slice %32 {offsets = [0, 0], sizes = [8, 128], strides = [1, 1]} : vector<8x512xf32> to vector<8x128xf32>
    %cst_30 = arith.constant 1.000000e+00 : f32
    %34 = vector.broadcast %cst_30 : f32 to vector<8x128xf32>
    %35 = arith.addf %33, %34 : vector<8x128xf32>
    %cst_31 = arith.constant 5.000000e-01 : f32
    %36 = vector.broadcast %cst_31 : f32 to vector<8x128xf32>
    %37 = arith.mulf %36, %35 : vector<8x128xf32>
    %38 = vector.extract_strided_slice %32 {offsets = [0, 128], sizes = [8, 128], strides = [1, 1]} : vector<8x512xf32> to vector<8x128xf32>
    %cst_32 = arith.constant 1.000000e+00 : f32
    %39 = vector.broadcast %cst_32 : f32 to vector<8x128xf32>
    %40 = arith.addf %38, %39 : vector<8x128xf32>
    %cst_33 = arith.constant 5.000000e-01 : f32
    %41 = vector.broadcast %cst_33 : f32 to vector<8x128xf32>
    %42 = arith.mulf %41, %40 : vector<8x128xf32>
    %43 = vector.extract_strided_slice %32 {offsets = [0, 256], sizes = [8, 128], strides = [1, 1]} : vector<8x512xf32> to vector<8x128xf32>
    %44 = vector.extract_strided_slice %32 {offsets = [0, 384], sizes = [8, 128], strides = [1, 1]} : vector<8x512xf32> to vector<8x128xf32>
    %cst_34 = arith.constant 1.000000e+00 : f32
    %45 = vector.broadcast %cst_34 : f32 to vector<8x128xf32>
    %46 = arith.addf %44, %45 : vector<8x128xf32>
    %cst_35 = arith.constant 5.000000e-01 : f32
    %47 = vector.broadcast %cst_35 : f32 to vector<8x128xf32>
    %48 = arith.mulf %47, %46 : vector<8x128xf32>
    %c0_36 = arith.constant 0 : index
    %c0_37 = arith.constant 0 : index
    %49 = vector.load %arg9[%c0_36, %c0_37] : memref<8x128xf32, #tpu.memory_space<vmem>>, vector<8x128xf32>
    %50 = arith.mulf %42, %49 : vector<8x128xf32>
    %51 = arith.mulf %37, %43 : vector<8x128xf32>
    %52 = arith.addf %50, %51 : vector<8x128xf32>
    %c0_38 = arith.constant 0 : index
    %c0_39 = arith.constant 0 : index
    %53 = vector.load %arg9[%c0_38, %c0_39] : memref<8x128xf32, #tpu.memory_space<vmem>>, vector<8x128xf32>
    tpu.vector_store %arg9[%c0_38, %c0_39], %52 {strides = array<i32>} : memref<8x128xf32, #tpu.memory_space<vmem>>, vector<8x128xf32>,
    %c0_40 = arith.constant 0 : index
    %c0_41 = arith.constant 0 : index
    %54 = vector.load %arg9[%c0_40, %c0_41] : memref<8x128xf32, #tpu.memory_space<vmem>>, vector<8x128xf32>
    %55 = math.tanh %54 : vector<8x128xf32>
    %56 = arith.mulf %48, %55 : vector<8x128xf32>
    %c0_42 = arith.constant 0 : index
    %c0_43 = arith.constant 0 : index
    %57 = vector.load %arg8[%c0_42, %c0_43] : memref<8x128xf32, #tpu.memory_space<vmem>>, vector<8x128xf32>
    tpu.vector_store %arg8[%c0_42, %c0_43], %56 {strides = array<i32>} : memref<8x128xf32, #tpu.memory_space<vmem>>, vector<8x128xf32>,
    %c0_44 = arith.constant 0 : index
    %c0_45 = arith.constant 0 : index
    %58 = vector.load %arg8[%c0_44, %c0_45] : memref<8x128xf32, #tpu.memory_space<vmem>>, vector<8x128xf32>
    %c0_46 = arith.constant 0 : index
    %c0_47 = arith.constant 0 : index
    %59 = vector.load %arg2[%c0_46, %c0_47] : memref<8x128xf32, #tpu.memory_space<vmem>>, vector<8x128xf32>
    %60 = arith.addf %58, %59 : vector<8x128xf32>
    %c0_48 = arith.constant 0 : index
    %c0_49 = arith.constant 0 : index
    %61 = vector.load %arg1[%c0_48, %c0_49] : memref<8x128xf32, #tpu.memory_space<vmem>>, vector<8x128xf32>
    %cst_50 = arith.constant dense<0.000000e+00> : vector<8x8xf32>
    %62 = tpu.matmul %60, %61, %cst_50 {dimension_numbers = #tpu.dot_dimension_numbers<[1], [1], [0], [0], [0, 0, 1, 0], [], []>} : vector<8x128xf32>, vector<8x128xf32>, vector<8x8xf32> -> vector<8x8xf32>
    %cst_51 = arith.constant dense<0xFF800000> : vector<8xf32>
    %63 = vector.multi_reduction <maximumf>, %62, %cst_51 [1] : vector<8x8xf32> to vector<8xf32>
    %64 = vector.shape_cast %63 : vector<8xf32> to vector<8x1xf32>
    %65 = vector.broadcast %64 : vector<8x1xf32> to vector<8x8xf32>
    %66 = arith.subf %62, %65 : vector<8x8xf32>
    %67 = math.exp %66 : vector<8x8xf32>
    %cst_52 = arith.constant dense<0.000000e+00> : vector<8xf32>
    %68 = vector.multi_reduction <add>, %67, %cst_52 [1] : vector<8x8xf32> to vector<8xf32>
    %69 = vector.shape_cast %68 : vector<8xf32> to vector<8x1xf32>
    %70 = vector.broadcast %69 : vector<8x1xf32> to vector<8x8xf32>
    %71 = arith.divf %67, %70 : vector<8x8xf32>
    %c0_53 = arith.constant 0 : index
    %c0_54 = arith.constant 0 : index
    %72 = vector.load %arg1[%c0_53, %c0_54] : memref<8x128xf32, #tpu.memory_space<vmem>>, vector<8x128xf32>
    %cst_55 = arith.constant dense<0.000000e+00> : vector<8x128xf32>
    %73 = tpu.matmul %71, %72, %cst_55 {dimension_numbers = #tpu.dot_dimension_numbers<[1], [0], [0], [1], [0, 0, 1, 1], [], []>} : vector<8x8xf32>, vector<8x128xf32>, vector<8x128xf32> -> vector<8x128xf32>
    %74 = arith.addf %60, %73 : vector<8x128xf32>
    %c0_56 = arith.constant 0 : index
    %c0_57 = arith.constant 0 : index
    %75 = vector.load %arg7[%c0_56, %c0_57] : memref<8x512xf32, #tpu.memory_space<vmem>>, vector<8x512xf32>
    %c0_58 = arith.constant 0 : index
    %c0_59 = arith.constant 0 : index
    %76 = vector.load %arg4[%c0_58, %c0_59] : memref<128x512xf32, #tpu.memory_space<vmem>>, vector<128x512xf32>
    %cst_60 = arith.constant dense<0.000000e+00> : vector<8x512xf32>
    %77 = tpu.matmul %74, %76, %cst_60 {dimension_numbers = #tpu.dot_dimension_numbers<[1], [0], [0], [1], [0, 0, 1, 1], [], []>} : vector<8x128xf32>, vector<128x512xf32>, vector<8x512xf32> -> vector<8x512xf32>
    %78 = arith.addf %75, %77 : vector<8x512xf32>
    %79 = math.tanh %78 : vector<8x512xf32>
    %80 = vector.extract_strided_slice %79 {offsets = [0, 0], sizes = [8, 128], strides = [1, 1]} : vector<8x512xf32> to vector<8x128xf32>
    %cst_61 = arith.constant 1.000000e+00 : f32
    %81 = vector.broadcast %cst_61 : f32 to vector<8x128xf32>
    %82 = arith.addf %80, %81 : vector<8x128xf32>
    %cst_62 = arith.constant 5.000000e-01 : f32
    %83 = vector.broadcast %cst_62 : f32 to vector<8x128xf32>
    %84 = arith.mulf %83, %82 : vector<8x128xf32>
    %85 = vector.extract_strided_slice %79 {offsets = [0, 128], sizes = [8, 128], strides = [1, 1]} : vector<8x512xf32> to vector<8x128xf32>
    %cst_63 = arith.constant 1.000000e+00 : f32
    %86 = vector.broadcast %cst_63 : f32 to vector<8x128xf32>
    %87 = arith.addf %85, %86 : vector<8x128xf32>
    %cst_64 = arith.constant 5.000000e-01 : f32
    %88 = vector.broadcast %cst_64 : f32 to vector<8x128xf32>
    %89 = arith.mulf %88, %87 : vector<8x128xf32>
    %90 = vector.extract_strided_slice %79 {offsets = [0, 256], sizes = [8, 128], strides = [1, 1]} : vector<8x512xf32> to vector<8x128xf32>
    %91 = vector.extract_strided_slice %79 {offsets = [0, 384], sizes = [8, 128], strides = [1, 1]} : vector<8x512xf32> to vector<8x128xf32>
    %cst_65 = arith.constant 1.000000e+00 : f32
    %92 = vector.broadcast %cst_65 : f32 to vector<8x128xf32>
    %93 = arith.addf %91, %92 : vector<8x128xf32>
    %cst_66 = arith.constant 5.000000e-01 : f32
    %94 = vector.broadcast %cst_66 : f32 to vector<8x128xf32>
    %95 = arith.mulf %94, %93 : vector<8x128xf32>
    %c0_67 = arith.constant 0 : index
    %c0_68 = arith.constant 0 : index
    %96 = vector.load %arg9[%c0_67, %c0_68] : memref<8x128xf32, #tpu.memory_space<vmem>>, vector<8x128xf32>
    %97 = arith.mulf %89, %96 : vector<8x128xf32>
    %98 = arith.mulf %84, %90 : vector<8x128xf32>
    %99 = arith.addf %97, %98 : vector<8x128xf32>
    %c0_69 = arith.constant 0 : index
    %c0_70 = arith.constant 0 : index
    %100 = vector.load %arg9[%c0_69, %c0_70] : memref<8x128xf32, #tpu.memory_space<vmem>>, vector<8x128xf32>
    tpu.vector_store %arg9[%c0_69, %c0_70], %99 {strides = array<i32>} : memref<8x128xf32, #tpu.memory_space<vmem>>, vector<8x128xf32>,
    %c0_71 = arith.constant 0 : index
    %c0_72 = arith.constant 0 : index
    %101 = vector.load %arg9[%c0_71, %c0_72] : memref<8x128xf32, #tpu.memory_space<vmem>>, vector<8x128xf32>
    %102 = math.tanh %101 : vector<8x128xf32>
    %103 = arith.mulf %95, %102 : vector<8x128xf32>
    %c0_73 = arith.constant 0 : index
    %c0_74 = arith.constant 0 : index
    %104 = vector.load %arg8[%c0_73, %c0_74] : memref<8x128xf32, #tpu.memory_space<vmem>>, vector<8x128xf32>
    tpu.vector_store %arg8[%c0_73, %c0_74], %103 {strides = array<i32>} : memref<8x128xf32, #tpu.memory_space<vmem>>, vector<8x128xf32>,
    %c0_75 = arith.constant 0 : index
    %c0_76 = arith.constant 0 : index
    %105 = vector.load %arg8[%c0_75, %c0_76] : memref<8x128xf32, #tpu.memory_space<vmem>>, vector<8x128xf32>
    %c0_77 = arith.constant 0 : index
    %c0_78 = arith.constant 0 : index
    %106 = vector.load %arg2[%c0_77, %c0_78] : memref<8x128xf32, #tpu.memory_space<vmem>>, vector<8x128xf32>
    %107 = arith.addf %105, %106 : vector<8x128xf32>
    %c0_79 = arith.constant 0 : index
    %c0_80 = arith.constant 0 : index
    %108 = vector.load %arg1[%c0_79, %c0_80] : memref<8x128xf32, #tpu.memory_space<vmem>>, vector<8x128xf32>
    %cst_81 = arith.constant dense<0.000000e+00> : vector<8x8xf32>
    %109 = tpu.matmul %107, %108, %cst_81 {dimension_numbers = #tpu.dot_dimension_numbers<[1], [1], [0], [0], [0, 0, 1, 0], [], []>} : vector<8x128xf32>, vector<8x128xf32>, vector<8x8xf32> -> vector<8x8xf32>
    %cst_82 = arith.constant dense<0xFF800000> : vector<8xf32>
    %110 = vector.multi_reduction <maximumf>, %109, %cst_82 [1] : vector<8x8xf32> to vector<8xf32>
    %111 = vector.shape_cast %110 : vector<8xf32> to vector<8x1xf32>
    %112 = vector.broadcast %111 : vector<8x1xf32> to vector<8x8xf32>
    %113 = arith.subf %109, %112 : vector<8x8xf32>
    %114 = math.exp %113 : vector<8x8xf32>
    %cst_83 = arith.constant dense<0.000000e+00> : vector<8xf32>
    %115 = vector.multi_reduction <add>, %114, %cst_83 [1] : vector<8x8xf32> to vector<8xf32>
    %116 = vector.shape_cast %115 : vector<8xf32> to vector<8x1xf32>
    %117 = vector.broadcast %116 : vector<8x1xf32> to vector<8x8xf32>
    %118 = arith.divf %114, %117 : vector<8x8xf32>
    %c0_84 = arith.constant 0 : index
    %c0_85 = arith.constant 0 : index
    %119 = vector.load %arg1[%c0_84, %c0_85] : memref<8x128xf32, #tpu.memory_space<vmem>>, vector<8x128xf32>
    %cst_86 = arith.constant dense<0.000000e+00> : vector<8x128xf32>
    %120 = tpu.matmul %118, %119, %cst_86 {dimension_numbers = #tpu.dot_dimension_numbers<[1], [0], [0], [1], [0, 0, 1, 1], [], []>} : vector<8x8xf32>, vector<8x128xf32>, vector<8x128xf32> -> vector<8x128xf32>
    %121 = arith.addf %107, %120 : vector<8x128xf32>
    %c0_87 = arith.constant 0 : index
    %c0_88 = arith.constant 0 : index
    %122 = vector.load %arg7[%c0_87, %c0_88] : memref<8x512xf32, #tpu.memory_space<vmem>>, vector<8x512xf32>
    %c0_89 = arith.constant 0 : index
    %c0_90 = arith.constant 0 : index
    %123 = vector.load %arg4[%c0_89, %c0_90] : memref<128x512xf32, #tpu.memory_space<vmem>>, vector<128x512xf32>
    %cst_91 = arith.constant dense<0.000000e+00> : vector<8x512xf32>
    %124 = tpu.matmul %121, %123, %cst_91 {dimension_numbers = #tpu.dot_dimension_numbers<[1], [0], [0], [1], [0, 0, 1, 1], [], []>} : vector<8x128xf32>, vector<128x512xf32>, vector<8x512xf32> -> vector<8x512xf32>
    %125 = arith.addf %122, %124 : vector<8x512xf32>
    %126 = math.tanh %125 : vector<8x512xf32>
    %127 = vector.extract_strided_slice %126 {offsets = [0, 0], sizes = [8, 128], strides = [1, 1]} : vector<8x512xf32> to vector<8x128xf32>
    %cst_92 = arith.constant 1.000000e+00 : f32
    %128 = vector.broadcast %cst_92 : f32 to vector<8x128xf32>
    %129 = arith.addf %127, %128 : vector<8x128xf32>
    %cst_93 = arith.constant 5.000000e-01 : f32
    %130 = vector.broadcast %cst_93 : f32 to vector<8x128xf32>
    %131 = arith.mulf %130, %129 : vector<8x128xf32>
    %132 = vector.extract_strided_slice %126 {offsets = [0, 128], sizes = [8, 128], strides = [1, 1]} : vector<8x512xf32> to vector<8x128xf32>
    %cst_94 = arith.constant 1.000000e+00 : f32
    %133 = vector.broadcast %cst_94 : f32 to vector<8x128xf32>
    %134 = arith.addf %132, %133 : vector<8x128xf32>
    %cst_95 = arith.constant 5.000000e-01 : f32
    %135 = vector.broadcast %cst_95 : f32 to vector<8x128xf32>
    %136 = arith.mulf %135, %134 : vector<8x128xf32>
    %137 = vector.extract_strided_slice %126 {offsets = [0, 256], sizes = [8, 128], strides = [1, 1]} : vector<8x512xf32> to vector<8x128xf32>
    %138 = vector.extract_strided_slice %126 {offsets = [0, 384], sizes = [8, 128], strides = [1, 1]} : vector<8x512xf32> to vector<8x128xf32>
    %cst_96 = arith.constant 1.000000e+00 : f32
    %139 = vector.broadcast %cst_96 : f32 to vector<8x128xf32>
    %140 = arith.addf %138, %139 : vector<8x128xf32>
    %cst_97 = arith.constant 5.000000e-01 : f32
    %141 = vector.broadcast %cst_97 : f32 to vector<8x128xf32>
    %142 = arith.mulf %141, %140 : vector<8x128xf32>
    %c0_98 = arith.constant 0 : index
    %c0_99 = arith.constant 0 : index
    %143 = vector.load %arg9[%c0_98, %c0_99] : memref<8x128xf32, #tpu.memory_space<vmem>>, vector<8x128xf32>
    %144 = arith.mulf %136, %143 : vector<8x128xf32>
    %145 = arith.mulf %131, %137 : vector<8x128xf32>
    %146 = arith.addf %144, %145 : vector<8x128xf32>
    %c0_100 = arith.constant 0 : index
    %c0_101 = arith.constant 0 : index
    %147 = vector.load %arg9[%c0_100, %c0_101] : memref<8x128xf32, #tpu.memory_space<vmem>>, vector<8x128xf32>
    tpu.vector_store %arg9[%c0_100, %c0_101], %146 {strides = array<i32>} : memref<8x128xf32, #tpu.memory_space<vmem>>, vector<8x128xf32>,
    %c0_102 = arith.constant 0 : index
    %c0_103 = arith.constant 0 : index
    %148 = vector.load %arg9[%c0_102, %c0_103] : memref<8x128xf32, #tpu.memory_space<vmem>>, vector<8x128xf32>
    %149 = math.tanh %148 : vector<8x128xf32>
    %150 = arith.mulf %142, %149 : vector<8x128xf32>
    %c0_104 = arith.constant 0 : index
    %c0_105 = arith.constant 0 : index
    %151 = vector.load %arg8[%c0_104, %c0_105] : memref<8x128xf32, #tpu.memory_space<vmem>>, vector<8x128xf32>
    tpu.vector_store %arg8[%c0_104, %c0_105], %150 {strides = array<i32>} : memref<8x128xf32, #tpu.memory_space<vmem>>, vector<8x128xf32>,
    %c0_106 = arith.constant 0 : index
    %c0_107 = arith.constant 0 : index
    %152 = vector.load %arg8[%c0_106, %c0_107] : memref<8x128xf32, #tpu.memory_space<vmem>>, vector<8x128xf32>
    %c0_108 = arith.constant 0 : index
    %c0_109 = arith.constant 0 : index
    %153 = vector.load %arg2[%c0_108, %c0_109] : memref<8x128xf32, #tpu.memory_space<vmem>>, vector<8x128xf32>
    %154 = arith.addf %152, %153 : vector<8x128xf32>
    %c0_110 = arith.constant 0 : index
    %c0_111 = arith.constant 0 : index
    %155 = vector.load %arg6[%c0_110, %c0_111] : memref<8x128xf32, #tpu.memory_space<vmem>>, vector<8x128xf32>
    tpu.vector_store %arg6[%c0_110, %c0_111], %154 {strides = array<i32>} : memref<8x128xf32, #tpu.memory_space<vmem>>, vector<8x128xf32>,
    return
  }
  func.func @transform_0(%arg0: i32) -> (i32, i32) {
    %c0_i32 = arith.constant 0 : i32
    %c0_i32_0 = arith.constant 0 : i32
    %c0_i32_1 = arith.constant 0 : i32
    return %c0_i32, %c0_i32_0 : i32, i32
  }
  func.func @transform_1(%arg0: i32) -> (i32, i32) {
    %c0_i32 = arith.constant 0 : i32
    %c0_i32_0 = arith.constant 0 : i32
    return %arg0, %c0_i32 : i32, i32
  }
  func.func @transform_2(%arg0: i32) -> (i32, i32) {
    %c0_i32 = arith.constant 0 : i32
    %c0_i32_0 = arith.constant 0 : i32
    %c0_i32_1 = arith.constant 0 : i32
    return %c0_i32, %c0_i32_0 : i32, i32
  }
  func.func @transform_3(%arg0: i32) -> (i32, i32) {
    %c0_i32 = arith.constant 0 : i32
    %c0_i32_0 = arith.constant 0 : i32
    %c0_i32_1 = arith.constant 0 : i32
    return %c0_i32, %c0_i32_0 : i32, i32
  }
  func.func @transform_4(%arg0: i32) -> (i32, i32) {
    %c0_i32 = arith.constant 0 : i32
    %c0_i32_0 = arith.constant 0 : i32
    %c0_i32_1 = arith.constant 0 : i32
    return %c0_i32, %c0_i32_0 : i32, i32
  }
  func.func @transform_5(%arg0: i32) -> (i32, i32) {
    %c0_i32 = arith.constant 0 : i32
    %c0_i32_0 = arith.constant 0 : i32
    return %arg0, %c0_i32 : i32, i32
  }
}

</mosaic_0001>

<llo_original>
// kernel: attention_lstm_forward.1
$region0: #{attention_lstm_forward.1}
  #allocation0 [shape = 'u32[]', space=smem, size = 0x4, offset = 0x4, fixed_abs, tag = 'smem constant byte address 0x4 - core index']
  #allocation1 [shape = 'u32[144,128]{1,0:T(1,128)}', space=vmem, size = 0x12000, scoped, tag = 'internal scratch']
  #allocation2 [shape = 'f32[8,512]{1,0:T(8,128)}', space=vmem, size = 0x4000, scoped, tag = 'scratch operand']
  #allocation3 [shape = 'f32[8,128]{1,0:T(8,128)}', space=vmem, size = 0x1000, scoped, tag = 'scratch operand']
  #allocation4 [shape = 'f32[8,128]{1,0:T(8,128)}', space=vmem, size = 0x1000, scoped, tag = 'scratch operand']
  %s0 = inlined_call_operand.vmem [shape: f32[8,128], index: 0, kind: input, shape index: {}]
  %s1 = inlined_call_operand.vmem [shape: f32[8,128], index: 1, kind: input, shape index: {}]
  %s2 = inlined_call_operand.hbm [shape: f32[128,512], index: 2, kind: input, shape index: {}]
  %s3 = inlined_call_operand.hbm [shape: f32[128,512], index: 3, kind: input, shape index: {}]
  %s4 = inlined_call_operand.vmem [shape: f32[1,512], index: 4, kind: input, shape index: {}]
  %s5 = inlined_call_operand.vmem [shape: f32[8,128], index: 5, kind: output, shape index: {}]
  %s6 = sld [smem:[#allocation0]]
  $region38: #{attention_lstm_forward.1} parent=0
    _
  %s8 = ssub.s32 1, %s6
  %s9 = scalar_select 0, %s8, %s6
  $region1: #{attention_lstm_forward.1} parent=0
    #allocation5 [shape = 'u8[262144]{0}', space=vmem, size = 0x40000, scoped, tag = 'input window, operand 2, single buffered']
    #allocation6 [shape = 's32[1]{0}', space=sflag, size = 0x4, scoped, tag = 'scoped memory for attention_lstm_forward.1']
    #allocation7 [shape = 'u8[262144]{0}', space=vmem, size = 0x40000, scoped, tag = 'input window, operand 3, single buffered']
    #allocation8 [shape = 's32[1]{0}', space=sflag, size = 0x4, scoped, tag = 'scoped memory for attention_lstm_forward.1']
    %10 = vsyncpa [#allocation6], 0
    %11 = vsyncpa [#allocation8], 0
    // Predicated region
    $region2: #{attention_lstm_forward.1} parent=1 // pred_check
      _
    $region3: #{attention_lstm_forward.1} parent=1 // pred_check_branch
      %13 = sbr.rel (0) target = $region5
    $region4: #{attention_lstm_forward.1} parent=1 // pred_region
      _
    $region5: #{attention_lstm_forward.1} parent=1 // pred_fallthru
      _
    // Predicated region
    $region6: #{attention_lstm_forward.1} parent=1 // pred_check
      _
    $region7: #{attention_lstm_forward.1} parent=1 // pred_check_branch
      %15 = sbr.rel (0) target = $region9
    $region8: #{attention_lstm_forward.1} parent=1 // pred_region
      _
    $region9: #{attention_lstm_forward.1} parent=1 // pred_fallthru
      _
    // Predicated region
    $region10: #{attention_lstm_forward.1} parent=1 // pred_check
      _
    $region11: #{attention_lstm_forward.1} parent=1 // pred_check_branch
      %17 = sbr.rel (0) target = $region13
    $region12: #{attention_lstm_forward.1} parent=1 // pred_region
      %s19 = ssub.s32 8192, 8192
      %20 = vsyncadd [#allocation6], %s19
      %s21 = sshll.u32 [#allocation5], 4
      %s22 = int_to_ptr.vmem [resolvable:$true] %s21
      %27 = dma.hbm_to_vmem [thread:$0]  %s2, 8192, %s22, [#allocation6], 512, 512, 32
    $region13: #{attention_lstm_forward.1} parent=1 // pred_fallthru
      _
    // Predicated region
    $region14: #{attention_lstm_forward.1} parent=1 // pred_check
      _
    $region15: #{attention_lstm_forward.1} parent=1 // pred_check_branch
      %29 = sbr.rel (0) target = $region17
    $region16: #{attention_lstm_forward.1} parent=1 // pred_region
      %s31 = ssub.s32 8192, 8192
      %32 = vsyncadd [#allocation8], %s31
      %s33 = sshll.u32 [#allocation7], 4
      %s34 = int_to_ptr.vmem [resolvable:$true] %s33
      %39 = dma.hbm_to_vmem [thread:$0]  %s3, 8192, %s34, [#allocation8], 512, 512, 32
    $region17: #{attention_lstm_forward.1} parent=1 // pred_fallthru
      _
    // Predicated region
    $region18: #{attention_lstm_forward.1} parent=1 // pred_check
      _
    $region19: #{attention_lstm_forward.1} parent=1 // pred_check_branch
      %41 = sbr.rel (0) target = $region21
    $region20: #{attention_lstm_forward.1} parent=1 // pred_region
      _
    $region21: #{attention_lstm_forward.1} parent=1 // pred_fallthru
      _
    // Predicated region
    $region22: #{attention_lstm_forward.1} parent=1 // pred_check
      _
    $region23: #{attention_lstm_forward.1} parent=1 // pred_check_branch
      %43 = sbr.rel (0) target = $region25
    $region24: #{attention_lstm_forward.1} parent=1 // pred_region
      %44 = dma.done [#allocation6], 8192
    $region25: #{attention_lstm_forward.1} parent=1 // pred_fallthru
      _
    // Predicated region
    $region26: #{attention_lstm_forward.1} parent=1 // pred_check
      _
    $region27: #{attention_lstm_forward.1} parent=1 // pred_check_branch
      %46 = sbr.rel (0) target = $region29
    $region28: #{attention_lstm_forward.1} parent=1 // pred_region
      %47 = dma.done [#allocation8], 8192
    $region29: #{attention_lstm_forward.1} parent=1 // pred_fallthru
      _
    %v48 = vld [vmem:[%s1] sm:$0xff]
    %v49 = vld [vmem:[#allocation5] sm:$0xff]
    %v50 = vld [vmem:[#allocation5 + $0x8] sm:$0xff]
    %v51 = vld [vmem:[#allocation5 + $0x10] sm:$0xff]
    %v52 = vld [vmem:[#allocation5 + $0x18] sm:$0xff]
    %v53 = vld [vmem:[#allocation5 + $0x20] sm:$0xff]
    %v54 = vld [vmem:[#allocation5 + $0x28] sm:$0xff]
    %v55 = vld [vmem:[#allocation5 + $0x30] sm:$0xff]
    %v56 = vld [vmem:[#allocation5 + $0x38] sm:$0xff]
    %v57 = vld [vmem:[#allocation5 + $0x40] sm:$0xff]
    %v58 = vld [vmem:[#allocation5 + $0x48] sm:$0xff]
    %v59 = vld [vmem:[#allocation5 + $0x50] sm:$0xff]
    %v60 = vld [vmem:[#allocation5 + $0x58] sm:$0xff]
    %v61 = vld [vmem:[#allocation5 + $0x60] sm:$0xff]
    %v62 = vld [vmem:[#allocation5 + $0x68] sm:$0xff]
    %v63 = vld [vmem:[#allocation5 + $0x70] sm:$0xff]
    %v64 = vld [vmem:[#allocation5 + $0x78] sm:$0xff]
    %v65 = vld [vmem:[#allocation5 + $0x80] sm:$0xff]
    %v66 = vld [vmem:[#allocation5 + $0x88] sm:$0xff]
    %v67 = vld [vmem:[#allocation5 + $0x90] sm:$0xff]
    %v68 = vld [vmem:[#allocation5 + $0x98] sm:$0xff]
    %v69 = vld [vmem:[#allocation5 + $0xa0] sm:$0xff]
    %v70 = vld [vmem:[#allocation5 + $0xa8] sm:$0xff]
    %v71 = vld [vmem:[#allocation5 + $0xb0] sm:$0xff]
    %v72 = vld [vmem:[#allocation5 + $0xb8] sm:$0xff]
    %v73 = vld [vmem:[#allocation5 + $0xc0] sm:$0xff]
    %v74 = vld [vmem:[#allocation5 + $0xc8] sm:$0xff]
    %v75 = vld [vmem:[#allocation5 + $0xd0] sm:$0xff]
    %v76 = vld [vmem:[#allocation5 + $0xd8] sm:$0xff]
    %v77 = vld [vmem:[#allocation5 + $0xe0] sm:$0xff]
    %v78 = vld [vmem:[#allocation5 + $0xe8] sm:$0xff]
    %v79 = vld [vmem:[#allocation5 + $0xf0] sm:$0xff]
    %v80 = vld [vmem:[#allocation5 + $0xf8] sm:$0xff]
    %v81 = vld [vmem:[#allocation5 + $0x100] sm:$0xff]
    %v82 = vld [vmem:[#allocation5 + $0x108] sm:$0xff]
    %v83 = vld [vmem:[#allocation5 + $0x110] sm:$0xff]
    %v84 = vld [vmem:[#allocation5 + $0x118] sm:$0xff]
    %v85 = vld [vmem:[#allocation5 + $0x120] sm:$0xff]
    %v86 = vld [vmem:[#allocation5 + $0x128] sm:$0xff]
    %v87 = vld [vmem:[#allocation5 + $0x130] sm:$0xff]
    %v88 = vld [vmem:[#allocation5 + $0x138] sm:$0xff]
    %v89 = vld [vmem:[#allocation5 + $0x140] sm:$0xff]
    %v90 = vld [vmem:[#allocation5 + $0x148] sm:$0xff]
    %v91 = vld [vmem:[#allocation5 + $0x150] sm:$0xff]
    %v92 = vld [vmem:[#allocation5 + $0x158] sm:$0xff]
    %v93 = vld [vmem:[#allocation5 + $0x160] sm:$0xff]
    %v94 = vld [vmem:[#allocation5 + $0x168] sm:$0xff]
    %v95 = vld [vmem:[#allocation5 + $0x170] sm:$0xff]
    %v96 = vld [vmem:[#allocation5 + $0x178] sm:$0xff]
    %v97 = vld [vmem:[#allocation5 + $0x180] sm:$0xff]
    %v98 = vld [vmem:[#allocation5 + $0x188] sm:$0xff]
    %v99 = vld [vmem:[#allocation5 + $0x190] sm:$0xff]
    %v100 = vld [vmem:[#allocation5 + $0x198] sm:$0xff]
    %v101 = vld [vmem:[#allocation5 + $0x1a0] sm:$0xff]
    %v102 = vld [vmem:[#allocation5 + $0x1a8] sm:$0xff]
    %v103 = vld [vmem:[#allocation5 + $0x1b0] sm:$0xff]
    %v104 = vld [vmem:[#allocation5 + $0x1b8] sm:$0xff]
    %v105 = vld [vmem:[#allocation5 + $0x1c0] sm:$0xff]
    %v106 = vld [vmem:[#allocation5 + $0x1c8] sm:$0xff]
    %v107 = vld [vmem:[#allocation5 + $0x1d0] sm:$0xff]
    %v108 = vld [vmem:[#allocation5 + $0x1d8] sm:$0xff]
    %v109 = vld [vmem:[#allocation5 + $0x1e0] sm:$0xff]
    %v110 = vld [vmem:[#allocation5 + $0x1e8] sm:$0xff]
    %v111 = vld [vmem:[#allocation5 + $0x1f0] sm:$0xff]
    %v112 = vld [vmem:[#allocation5 + $0x1f8] sm:$0xff]
    %v113 = vld [vmem:[%s4] sm:$0xf]
    %v115 = vlaneseq
    %v116 = vshrl.u32 %v115, 7
    %v117 = vsub.s32 0, %v116
    %v118 = vrot.slane %v113, %v117
    %v119 = vlaneseq
    %v120 = vshrl.u32 %v119, 7
    %v121 = vsub.s32 1, %v120
    %v122 = vrot.slane %v113, %v121
    %v123 = vlaneseq
    %v124 = vshrl.u32 %v123, 7
    %v125 = vsub.s32 2, %v124
    %v126 = vrot.slane %v113, %v125
    %v127 = vlaneseq
    %v128 = vshrl.u32 %v127, 7
    %v129 = vsub.s32 3, %v128
    %v130 = vrot.slane %v113, %v129
    %135 = vmatprep.subr.mxu0 %v50
    %136 = vmatpush1.msra.mxu0 %v49
    %137 = vmatprep.subr.mxu0 %v54
    %138 = vmatpush1.msra.mxu0 %v53
    %139 = vmatprep.subr.mxu0 %v58
    %140 = vmatpush1.msra.mxu0 %v57
    %141 = vmatprep.subr.mxu0 %v62
    %142 = vmatpush1.msra.mxu0 %v61
    %143 = vmatprep.subr.mxu0 %v66
    %144 = vmatpush1.msra.mxu0 %v65
    %145 = vmatprep.subr.mxu0 %v70
    %146 = vmatpush1.msra.mxu0 %v69
    %147 = vmatprep.subr.mxu0 %v74
    %148 = vmatpush1.msra.mxu0 %v73
    %149 = vmatprep.subr.mxu0 %v78
    %150 = vmatpush1.msra.mxu0 %v77
    %151 = vmatprep.subr.mxu0 %v82
    %152 = vmatpush1.msra.mxu0 %v81
    %153 = vmatprep.subr.mxu0 %v86
    %154 = vmatpush1.msra.mxu0 %v85
    %155 = vmatprep.subr.mxu0 %v90
    %156 = vmatpush1.msra.mxu0 %v89
    %157 = vmatprep.subr.mxu0 %v94
    %158 = vmatpush1.msra.mxu0 %v93
    %159 = vmatprep.subr.mxu0 %v98
    %160 = vmatpush1.msra.mxu0 %v97
    %161 = vmatprep.subr.mxu0 %v102
    %162 = vmatpush1.msra.mxu0 %v101
    %163 = vmatprep.subr.mxu0 %v106
    %164 = vmatpush1.msra.mxu0 %v105
    %165 = vmatprep.subr.mxu0 %v110
    %166 = vmatpush1.msra.mxu0 %v109
    %167 = vmatprep.subr.mxu0 0.0
    %168 = vmatpush1.msra.mxu0 0.0
    %169 = vmatprep.subr.mxu0 0.0
    %170 = vmatpush1.msra.mxu0 0.0
    %171 = vmatprep.subr.mxu0 0.0
    %172 = vmatpush1.msra.mxu0 0.0
    %173 = vmatprep.subr.mxu0 0.0
    %174 = vmatpush1.msra.mxu0 0.0
    %175 = vmatprep.subr.mxu0 0.0
    %176 = vmatpush1.msra.mxu0 0.0
    %177 = vmatprep.subr.mxu0 0.0
    %178 = vmatpush1.msra.mxu0 0.0
    %179 = vmatprep.subr.mxu0 0.0
    %180 = vmatpush1.msra.mxu0 0.0
    %181 = vmatprep.subr.mxu0 0.0
    %182 = vmatpush1.msra.mxu0 0.0
    %183 = vmatprep.subr.mxu0 0.0
    %184 = vmatpush1.msra.mxu0 0.0
    %185 = vmatprep.subr.mxu0 0.0
    %186 = vmatpush1.msra.mxu0 0.0
    %187 = vmatprep.subr.mxu0 0.0
    %188 = vmatpush1.msra.mxu0 0.0
    %189 = vmatprep.subr.mxu0 0.0
    %190 = vmatpush1.msra.mxu0 0.0
    %191 = vmatprep.subr.mxu0 0.0
    %192 = vmatpush1.msra.mxu0 0.0
    %193 = vmatprep.subr.mxu0 0.0
    %194 = vmatpush1.msra.mxu0 0.0
    %195 = vmatprep.subr.mxu0 0.0
    %196 = vmatpush1.msra.mxu0 0.0
    %197 = vmatprep.subr.mxu0 0.0
    %198 = vmatpush1.msra.mxu0 0.0
    %199 = vmatprep.mubr.f32.mxu0 0.0
    %200 = vmatmul.mubr.f32.gmra.mrb[0].mxu0 %v48
    %v201 = vpop.f32.mrb[0].mxu0
    %v202 = vadd.f32 %v118, %v201
    %v203 = vpop.f32.mrb[0].mxu0
    %v204 = vadd.f32 %v122, %v203
    %205 = vdwg.mxu0
    %206 = vmatprep.subr.mxu0 %v52
    %207 = vmatpush1.msra.mxu0 %v51
    %208 = vmatprep.subr.mxu0 %v56
    %209 = vmatpush1.msra.mxu0 %v55
    %210 = vmatprep.subr.mxu0 %v60
    %211 = vmatpush1.msra.mxu0 %v59
    %212 = vmatprep.subr.mxu0 %v64
    %213 = vmatpush1.msra.mxu0 %v63
    %214 = vmatprep.subr.mxu0 %v68
    %215 = vmatpush1.msra.mxu0 %v67
    %216 = vmatprep.subr.mxu0 %v72
    %217 = vmatpush1.msra.mxu0 %v71
    %218 = vmatprep.subr.mxu0 %v76
    %219 = vmatpush1.msra.mxu0 %v75
    %220 = vmatprep.subr.mxu0 %v80
    %221 = vmatpush1.msra.mxu0 %v79
    %222 = vmatprep.subr.mxu0 %v84
    %223 = vmatpush1.msra.mxu0 %v83
    %224 = vmatprep.subr.mxu0 %v88
    %225 = vmatpush1.msra.mxu0 %v87
    %226 = vmatprep.subr.mxu0 %v92
    %227 = vmatpush1.msra.mxu0 %v91
    %228 = vmatprep.subr.mxu0 %v96
    %229 = vmatpush1.msra.mxu0 %v95
    %230 = vmatprep.subr.mxu0 %v100
    %231 = vmatpush1.msra.mxu0 %v99
    %232 = vmatprep.subr.mxu0 %v104
    %233 = vmatpush1.msra.mxu0 %v103
    %234 = vmatprep.subr.mxu0 %v108
    %235 = vmatpush1.msra.mxu0 %v107
    %236 = vmatprep.subr.mxu0 %v112
    %237 = vmatpush1.msra.mxu0 %v111
    %238 = vmatprep.subr.mxu0 0.0
    %239 = vmatpush1.msra.mxu0 0.0
    %240 = vmatprep.subr.mxu0 0.0
    %241 = vmatpush1.msra.mxu0 0.0
    %242 = vmatprep.subr.mxu0 0.0
    %243 = vmatpush1.msra.mxu0 0.0
    %244 = vmatprep.subr.mxu0 0.0
    %245 = vmatpush1.msra.mxu0 0.0
    %246 = vmatprep.subr.mxu0 0.0
    %247 = vmatpush1.msra.mxu0 0.0
    %248 = vmatprep.subr.mxu0 0.0
    %249 = vmatpush1.msra.mxu0 0.0
    %250 = vmatprep.subr.mxu0 0.0
    %251 = vmatpush1.msra.mxu0 0.0
    %252 = vmatprep.subr.mxu0 0.0
    %253 = vmatpush1.msra.mxu0 0.0
    %254 = vmatprep.subr.mxu0 0.0
    %255 = vmatpush1.msra.mxu0 0.0
    %256 = vmatprep.subr.mxu0 0.0
    %257 = vmatpush1.msra.mxu0 0.0
    %258 = vmatprep.subr.mxu0 0.0
    %259 = vmatpush1.msra.mxu0 0.0
    %260 = vmatprep.subr.mxu0 0.0
    %261 = vmatpush1.msra.mxu0 0.0
    %262 = vmatprep.subr.mxu0 0.0
    %263 = vmatpush1.msra.mxu0 0.0
    %264 = vmatprep.subr.mxu0 0.0
    %265 = vmatpush1.msra.mxu0 0.0
    %266 = vmatprep.subr.mxu0 0.0
    %267 = vmatpush1.msra.mxu0 0.0
    %268 = vmatprep.subr.mxu0 0.0
    %269 = vmatpush1.msra.mxu0 0.0
    %270 = vmatprep.mubr.f32.mxu0 0.0
    %271 = vmatmul.mubr.f32.gmra.mrb[0].mxu0 %v48
    %v272 = vpop.f32.mrb[0].mxu0
    %v273 = vadd.f32 %v126, %v272
    %v274 = vpop.f32.mrb[0].mxu0
    %v275 = vadd.f32 %v130, %v274
    %276 = vdwg.mxu0
    %277 = vst [vmem:[#allocation2] sm:$0xff] %v202
    %278 = vst [vmem:[#allocation2 + $0x8] sm:$0xff] %v204
    %279 = vst [vmem:[#allocation2 + $0x10] sm:$0xff] %v273
    %280 = vst [vmem:[#allocation2 + $0x18] sm:$0xff] %v275
    %281 = vst [vmem:[#allocation3] sm:$0xff] 0.0
    %282 = vst [vmem:[#allocation4] sm:$0xff] 0.0
    %v283 = vld [vmem:[#allocation3] sm:$0xff]
    %v284 = vld [vmem:[%s1] sm:$0xff]
    %v285 = vadd.f32 %v283, %v284
    %v286 = vld [vmem:[%s0] sm:$0xff]
    %287 = vmatprep.subr.mxu0 0.0
    %288 = vmatpush1.xpose.msra.mxu0 %v286
    %289 = vmatprep.subr.mxu0 0.0
    %290 = vmatpush1.xpose.msra.mxu0 0.0
    %291 = vmatprep.subr.mxu0 0.0
    %292 = vmatpush1.xpose.msra.mxu0 0.0
    %293 = vmatprep.subr.mxu0 0.0
    %294 = vmatpush1.xpose.msra.mxu0 0.0
    %295 = vmatprep.subr.mxu0 0.0
    %296 = vmatpush1.xpose.msra.mxu0 0.0
    %297 = vmatprep.subr.mxu0 0.0
    %298 = vmatpush1.xpose.msra.mxu0 0.0
    %299 = vmatprep.subr.mxu0 0.0
    %300 = vmatpush1.xpose.msra.mxu0 0.0
    %301 = vmatprep.subr.mxu0 0.0
    %302 = vmatpush1.xpose.msra.mxu0 0.0
    %303 = vmatprep.subr.mxu0 0.0
    %304 = vmatpush1.xpose.msra.mxu0 0.0
    %305 = vmatprep.subr.mxu0 0.0
    %306 = vmatpush1.xpose.msra.mxu0 0.0
    %307 = vmatprep.subr.mxu0 0.0
    %308 = vmatpush1.xpose.msra.mxu0 0.0
    %309 = vmatprep.subr.mxu0 0.0
    %310 = vmatpush1.xpose.msra.mxu0 0.0
    %311 = vmatprep.subr.mxu0 0.0
    %312 = vmatpush1.xpose.msra.mxu0 0.0
    %313 = vmatprep.subr.mxu0 0.0
    %314 = vmatpush1.xpose.msra.mxu0 0.0
    %315 = vmatprep.subr.mxu0 0.0
    %316 = vmatpush1.xpose.msra.mxu0 0.0
    %317 = vmatprep.subr.mxu0 0.0
    %318 = vmatpush1.xpose.msra.mxu0 0.0
    %319 = vmatprep.subr.mxu0 0.0
    %320 = vmatpush1.xpose.msra.mxu0 0.0
    %321 = vmatprep.subr.mxu0 0.0
    %322 = vmatpush1.xpose.msra.mxu0 0.0
    %323 = vmatprep.subr.mxu0 0.0
    %324 = vmatpush1.xpose.msra.mxu0 0.0
    %325 = vmatprep.subr.mxu0 0.0
    %326 = vmatpush1.xpose.msra.mxu0 0.0
    %327 = vmatprep.subr.mxu0 0.0
    %328 = vmatpush1.xpose.msra.mxu0 0.0
    %329 = vmatprep.subr.mxu0 0.0
    %330 = vmatpush1.xpose.msra.mxu0 0.0
    %331 = vmatprep.subr.mxu0 0.0
    %332 = vmatpush1.xpose.msra.mxu0 0.0
    %333 = vmatprep.subr.mxu0 0.0
    %334 = vmatpush1.xpose.msra.mxu0 0.0
    %335 = vmatprep.subr.mxu0 0.0
    %336 = vmatpush1.xpose.msra.mxu0 0.0
    %337 = vmatprep.subr.mxu0 0.0
    %338 = vmatpush1.xpose.msra.mxu0 0.0
    %339 = vmatprep.subr.mxu0 0.0
    %340 = vmatpush1.xpose.msra.mxu0 0.0
    %341 = vmatprep.subr.mxu0 0.0
    %342 = vmatpush1.xpose.msra.mxu0 0.0
    %343 = vmatprep.subr.mxu0 0.0
    %344 = vmatpush1.xpose.msra.mxu0 0.0
    %345 = vmatprep.subr.mxu0 0.0
    %346 = vmatpush1.xpose.msra.mxu0 0.0
    %347 = vmatprep.subr.mxu0 0.0
    %348 = vmatpush1.xpose.msra.mxu0 0.0
    %349 = vmatprep.subr.mxu0 0.0
    %350 = vmatpush1.xpose.msra.mxu0 0.0
    %351 = vmatprep.mubr.f32.mxu0 0.0
    %352 = vmatmul.mubr.f32.gmra.mrb[0].mxu0 %v285
    %v353 = vpop.f32.mrb[0].mxu0
    %v354 = vadd.f32 0.0, %v353
    %v355 = vpop.f32.mrb[0].mxu0
    %356 = vdwg.mxu0
    %vm357 = vcmask 64512
    %v358 = vsel %vm357, %v354, -inf
    %359 = vmax.xlane.f32.xlu0 %v358
    %v360 = vpop.xlane.xlu0 %359
    %v361 = vsub.f32 %v354, %v360
    %v362 = vmul.f32 %v361, 1.442695
    %v363 = vpow.pop %v362
    %v364 = vsel %vm357, %v363, 0.0
    %365 = vadd.xlane.f32.xlu0 %v364
    %v366 = vpop.xlane.xlu0 %365
    %v367 = vrcp.pop %v366
    %v368 = vmul.f32 %v363, %v367
    %v370 = vsel %vm357, %v368, 0
    %372 = vmatprep.subr.mxu0 0.0
    %373 = vmatpush1.msra.mxu0 %v286
    %374 = vmatprep.subr.mxu0 0.0
    %375 = vmatpush1.msra.mxu0 0.0
    %376 = vmatprep.subr.mxu0 0.0
    %377 = vmatpush1.msra.mxu0 0.0
    %378 = vmatprep.subr.mxu0 0.0
    %379 = vmatpush1.msra.mxu0 0.0
    %380 = vmatprep.subr.mxu0 0.0
    %381 = vmatpush1.msra.mxu0 0.0
    %382 = vmatprep.subr.mxu0 0.0
    %383 = vmatpush1.msra.mxu0 0.0
    %384 = vmatprep.subr.mxu0 0.0
    %385 = vmatpush1.msra.mxu0 0.0
    %386 = vmatprep.subr.mxu0 0.0
    %387 = vmatpush1.msra.mxu0 0.0
    %388 = vmatprep.subr.mxu0 0.0
    %389 = vmatpush1.msra.mxu0 0.0
    %390 = vmatprep.subr.mxu0 0.0
    %391 = vmatpush1.msra.mxu0 0.0
    %392 = vmatprep.subr.mxu0 0.0
    %393 = vmatpush1.msra.mxu0 0.0
    %394 = vmatprep.subr.mxu0 0.0
    %395 = vmatpush1.msra.mxu0 0.0
    %396 = vmatprep.subr.mxu0 0.0
    %397 = vmatpush1.msra.mxu0 0.0
    %398 = vmatprep.subr.mxu0 0.0
    %399 = vmatpush1.msra.mxu0 0.0
    %400 = vmatprep.subr.mxu0 0.0
    %401 = vmatpush1.msra.mxu0 0.0
    %402 = vmatprep.subr.mxu0 0.0
    %403 = vmatpush1.msra.mxu0 0.0
    %404 = vmatprep.subr.mxu0 0.0
    %405 = vmatpush1.msra.mxu0 0.0
    %406 = vmatprep.subr.mxu0 0.0
    %407 = vmatpush1.msra.mxu0 0.0
    %408 = vmatprep.subr.mxu0 0.0
    %409 = vmatpush1.msra.mxu0 0.0
    %410 = vmatprep.subr.mxu0 0.0
    %411 = vmatpush1.msra.mxu0 0.0
    %412 = vmatprep.subr.mxu0 0.0
    %413 = vmatpush1.msra.mxu0 0.0
    %414 = vmatprep.subr.mxu0 0.0
    %415 = vmatpush1.msra.mxu0 0.0
    %416 = vmatprep.subr.mxu0 0.0
    %417 = vmatpush1.msra.mxu0 0.0
    %418 = vmatprep.subr.mxu0 0.0
    %419 = vmatpush1.msra.mxu0 0.0
    %420 = vmatprep.subr.mxu0 0.0
    %421 = vmatpush1.msra.mxu0 0.0
    %422 = vmatprep.subr.mxu0 0.0
    %423 = vmatpush1.msra.mxu0 0.0
    %424 = vmatprep.subr.mxu0 0.0
    %425 = vmatpush1.msra.mxu0 0.0
    %426 = vmatprep.subr.mxu0 0.0
    %427 = vmatpush1.msra.mxu0 0.0
    %428 = vmatprep.subr.mxu0 0.0
    %429 = vmatpush1.msra.mxu0 0.0
    %430 = vmatprep.subr.mxu0 0.0
    %431 = vmatpush1.msra.mxu0 0.0
    %432 = vmatprep.subr.mxu0 0.0
    %433 = vmatpush1.msra.mxu0 0.0
    %434 = vmatprep.subr.mxu0 0.0
    %435 = vmatpush1.msra.mxu0 0.0
    %436 = vmatprep.mubr.f32.mxu0 0.0
    %437 = vmatmul.mubr.f32.gmra.mrb[0].mxu0 %v370
    %v438 = vpop.f32.mrb[0].mxu0
    %v439 = vadd.f32 0.0, %v438
    %v440 = vpop.f32.mrb[0].mxu0
    %441 = vdwg.mxu0
    %v442 = vadd.f32 %v285, %v439
    %v443 = vld [vmem:[#allocation2] sm:$0xff]
    %v444 = vld [vmem:[#allocation2 + $0x8] sm:$0xff]
    %v445 = vld [vmem:[#allocation2 + $0x10] sm:$0xff]
    %v446 = vld [vmem:[#allocation2 + $0x18] sm:$0xff]
    %v447 = vld [vmem:[#allocation7] sm:$0xff]
    %v448 = vld [vmem:[#allocation7 + $0x8] sm:$0xff]
    %v449 = vld [vmem:[#allocation7 + $0x10] sm:$0xff]
    %v450 = vld [vmem:[#allocation7 + $0x18] sm:$0xff]
    %v451 = vld [vmem:[#allocation7 + $0x20] sm:$0xff]
    %v452 = vld [vmem:[#allocation7 + $0x28] sm:$0xff]
    %v453 = vld [vmem:[#allocation7 + $0x30] sm:$0xff]
    %v454 = vld [vmem:[#allocation7 + $0x38] sm:$0xff]
    %v455 = vld [vmem:[#allocation7 + $0x40] sm:$0xff]
    %v456 = vld [vmem:[#allocation7 + $0x48] sm:$0xff]
    %v457 = vld [vmem:[#allocation7 + $0x50] sm:$0xff]
    %v458 = vld [vmem:[#allocation7 + $0x58] sm:$0xff]
    %v459 = vld [vmem:[#allocation7 + $0x60] sm:$0xff]
    %v460 = vld [vmem:[#allocation7 + $0x68] sm:$0xff]
    %v461 = vld [vmem:[#allocation7 + $0x70] sm:$0xff]
    %v462 = vld [vmem:[#allocation7 + $0x78] sm:$0xff]
    %v463 = vld [vmem:[#allocation7 + $0x80] sm:$0xff]
    %v464 = vld [vmem:[#allocation7 + $0x88] sm:$0xff]
    %v465 = vld [vmem:[#allocation7 + $0x90] sm:$0xff]
    %v466 = vld [vmem:[#allocation7 + $0x98] sm:$0xff]
    %v467 = vld [vmem:[#allocation7 + $0xa0] sm:$0xff]
    %v468 = vld [vmem:[#allocation7 + $0xa8] sm:$0xff]
    %v469 = vld [vmem:[#allocation7 + $0xb0] sm:$0xff]
    %v470 = vld [vmem:[#allocation7 + $0xb8] sm:$0xff]
    %v471 = vld [vmem:[#allocation7 + $0xc0] sm:$0xff]
    %v472 = vld [vmem:[#allocation7 + $0xc8] sm:$0xff]
    %v473 = vld [vmem:[#allocation7 + $0xd0] sm:$0xff]
    %v474 = vld [vmem:[#allocation7 + $0xd8] sm:$0xff]
    %v475 = vld [vmem:[#allocation7 + $0xe0] sm:$0xff]
    %v476 = vld [vmem:[#allocation7 + $0xe8] sm:$0xff]
    %v477 = vld [vmem:[#allocation7 + $0xf0] sm:$0xff]
    %v478 = vld [vmem:[#allocation7 + $0xf8] sm:$0xff]
    %v479 = vld [vmem:[#allocation7 + $0x100] sm:$0xff]
    %v480 = vld [vmem:[#allocation7 + $0x108] sm:$0xff]
    %v481 = vld [vmem:[#allocation7 + $0x110] sm:$0xff]
    %v482 = vld [vmem:[#allocation7 + $0x118] sm:$0xff]
    %v483 = vld [vmem:[#allocation7 + $0x120] sm:$0xff]
    %v484 = vld [vmem:[#allocation7 + $0x128] sm:$0xff]
    %v485 = vld [vmem:[#allocation7 + $0x130] sm:$0xff]
    %v486 = vld [vmem:[#allocation7 + $0x138] sm:$0xff]
    %v487 = vld [vmem:[#allocation7 + $0x140] sm:$0xff]
    %v488 = vld [vmem:[#allocation7 + $0x148] sm:$0xff]
    %v489 = vld [vmem:[#allocation7 + $0x150] sm:$0xff]
    %v490 = vld [vmem:[#allocation7 + $0x158] sm:$0xff]
    %v491 = vld [vmem:[#allocation7 + $0x160] sm:$0xff]
    %v492 = vld [vmem:[#allocation7 + $0x168] sm:$0xff]
    %v493 = vld [vmem:[#allocation7 + $0x170] sm:$0xff]
    %v494 = vld [vmem:[#allocation7 + $0x178] sm:$0xff]
    %v495 = vld [vmem:[#allocation7 + $0x180] sm:$0xff]
    %v496 = vld [vmem:[#allocation7 + $0x188] sm:$0xff]
    %v497 = vld [vmem:[#allocation7 + $0x190] sm:$0xff]
    %v498 = vld [vmem:[#allocation7 + $0x198] sm:$0xff]
    %v499 = vld [vmem:[#allocation7 + $0x1a0] sm:$0xff]
    %v500 = vld [vmem:[#allocation7 + $0x1a8] sm:$0xff]
    %v501 = vld [vmem:[#allocation7 + $0x1b0] sm:$0xff]
    %v502 = vld [vmem:[#allocation7 + $0x1b8] sm:$0xff]
    %v503 = vld [vmem:[#allocation7 + $0x1c0] sm:$0xff]
    %v504 = vld [vmem:[#allocation7 + $0x1c8] sm:$0xff]
    %v505 = vld [vmem:[#allocation7 + $0x1d0] sm:$0xff]
    %v506 = vld [vmem:[#allocation7 + $0x1d8] sm:$0xff]
    %v507 = vld [vmem:[#allocation7 + $0x1e0] sm:$0xff]
    %v508 = vld [vmem:[#allocation7 + $0x1e8] sm:$0xff]
    %v509 = vld [vmem:[#allocation7 + $0x1f0] sm:$0xff]
    %v510 = vld [vmem:[#allocation7 + $0x1f8] sm:$0xff]
    %511 = vmatprep.subr.mxu0 %v448
    %512 = vmatpush1.msra.mxu0 %v447
    %513 = vmatprep.subr.mxu0 %v452
    %514 = vmatpush1.msra.mxu0 %v451
    %515 = vmatprep.subr.mxu0 %v456
    %516 = vmatpush1.msra.mxu0 %v455
    %517 = vmatprep.subr.mxu0 %v460
    %518 = vmatpush1.msra.mxu0 %v459
    %519 = vmatprep.subr.mxu0 %v464
    %520 = vmatpush1.msra.mxu0 %v463
    %521 = vmatprep.subr.mxu0 %v468
    %522 = vmatpush1.msra.mxu0 %v467
    %523 = vmatprep.subr.mxu0 %v472
    %524 = vmatpush1.msra.mxu0 %v471
    %525 = vmatprep.subr.mxu0 %v476
    %526 = vmatpush1.msra.mxu0 %v475
    %527 = vmatprep.subr.mxu0 %v480
    %528 = vmatpush1.msra.mxu0 %v479
    %529 = vmatprep.subr.mxu0 %v484
    %530 = vmatpush1.msra.mxu0 %v483
    %531 = vmatprep.subr.mxu0 %v488
    %532 = vmatpush1.msra.mxu0 %v487
    %533 = vmatprep.subr.mxu0 %v492
    %534 = vmatpush1.msra.mxu0 %v491
    %535 = vmatprep.subr.mxu0 %v496
    %536 = vmatpush1.msra.mxu0 %v495
    %537 = vmatprep.subr.mxu0 %v500
    %538 = vmatpush1.msra.mxu0 %v499
    %539 = vmatprep.subr.mxu0 %v504
    %540 = vmatpush1.msra.mxu0 %v503
    %541 = vmatprep.subr.mxu0 %v508
    %542 = vmatpush1.msra.mxu0 %v507
    %543 = vmatprep.subr.mxu0 0.0
    %544 = vmatpush1.msra.mxu0 0.0
    %545 = vmatprep.subr.mxu0 0.0
    %546 = vmatpush1.msra.mxu0 0.0
    %547 = vmatprep.subr.mxu0 0.0
    %548 = vmatpush1.msra.mxu0 0.0
    %549 = vmatprep.subr.mxu0 0.0
    %550 = vmatpush1.msra.mxu0 0.0
    %551 = vmatprep.subr.mxu0 0.0
    %552 = vmatpush1.msra.mxu0 0.0
    %553 = vmatprep.subr.mxu0 0.0
    %554 = vmatpush1.msra.mxu0 0.0
    %555 = vmatprep.subr.mxu0 0.0
    %556 = vmatpush1.msra.mxu0 0.0
    %557 = vmatprep.subr.mxu0 0.0
    %558 = vmatpush1.msra.mxu0 0.0
    %559 = vmatprep.subr.mxu0 0.0
    %560 = vmatpush1.msra.mxu0 0.0
    %561 = vmatprep.subr.mxu0 0.0
    %562 = vmatpush1.msra.mxu0 0.0
    %563 = vmatprep.subr.mxu0 0.0
    %564 = vmatpush1.msra.mxu0 0.0
    %565 = vmatprep.subr.mxu0 0.0
    %566 = vmatpush1.msra.mxu0 0.0
    %567 = vmatprep.subr.mxu0 0.0
    %568 = vmatpush1.msra.mxu0 0.0
    %569 = vmatprep.subr.mxu0 0.0
    %570 = vmatpush1.msra.mxu0 0.0
    %571 = vmatprep.subr.mxu0 0.0
    %572 = vmatpush1.msra.mxu0 0.0
    %573 = vmatprep.subr.mxu0 0.0
    %574 = vmatpush1.msra.mxu0 0.0
    %575 = vmatprep.mubr.f32.mxu0 0.0
    %576 = vmatmul.mubr.f32.gmra.mrb[0].mxu0 %v442
    %v577 = vpop.f32.mrb[0].mxu0
    %v578 = vadd.f32 0.0, %v577
    %v579 = vpop.f32.mrb[0].mxu0
    %v580 = vadd.f32 0.0, %v579
    %581 = vdwg.mxu0
    %582 = vmatprep.subr.mxu0 %v450
    %583 = vmatpush1.msra.mxu0 %v449
    %584 = vmatprep.subr.mxu0 %v454
    %585 = vmatpush1.msra.mxu0 %v453
    %586 = vmatprep.subr.mxu0 %v458
    %587 = vmatpush1.msra.mxu0 %v457
    %588 = vmatprep.subr.mxu0 %v462
    %589 = vmatpush1.msra.mxu0 %v461
    %590 = vmatprep.subr.mxu0 %v466
    %591 = vmatpush1.msra.mxu0 %v465
    %592 = vmatprep.subr.mxu0 %v470
    %593 = vmatpush1.msra.mxu0 %v469
    %594 = vmatprep.subr.mxu0 %v474
    %595 = vmatpush1.msra.mxu0 %v473
    %596 = vmatprep.subr.mxu0 %v478
    %597 = vmatpush1.msra.mxu0 %v477
    %598 = vmatprep.subr.mxu0 %v482
    %599 = vmatpush1.msra.mxu0 %v481
    %600 = vmatprep.subr.mxu0 %v486
    %601 = vmatpush1.msra.mxu0 %v485
    %602 = vmatprep.subr.mxu0 %v490
    %603 = vmatpush1.msra.mxu0 %v489
    %604 = vmatprep.subr.mxu0 %v494
    %605 = vmatpush1.msra.mxu0 %v493
    %606 = vmatprep.subr.mxu0 %v498
    %607 = vmatpush1.msra.mxu0 %v497
    %608 = vmatprep.subr.mxu0 %v502
    %609 = vmatpush1.msra.mxu0 %v501
    %610 = vmatprep.subr.mxu0 %v506
    %611 = vmatpush1.msra.mxu0 %v505
    %612 = vmatprep.subr.mxu0 %v510
    %613 = vmatpush1.msra.mxu0 %v509
    %614 = vmatprep.subr.mxu0 0.0
    %615 = vmatpush1.msra.mxu0 0.0
    %616 = vmatprep.subr.mxu0 0.0
    %617 = vmatpush1.msra.mxu0 0.0
    %618 = vmatprep.subr.mxu0 0.0
    %619 = vmatpush1.msra.mxu0 0.0
    %620 = vmatprep.subr.mxu0 0.0
    %621 = vmatpush1.msra.mxu0 0.0
    %622 = vmatprep.subr.mxu0 0.0
    %623 = vmatpush1.msra.mxu0 0.0
    %624 = vmatprep.subr.mxu0 0.0
    %625 = vmatpush1.msra.mxu0 0.0
    %626 = vmatprep.subr.mxu0 0.0
    %627 = vmatpush1.msra.mxu0 0.0
    %628 = vmatprep.subr.mxu0 0.0
    %629 = vmatpush1.msra.mxu0 0.0
    %630 = vmatprep.subr.mxu0 0.0
    %631 = vmatpush1.msra.mxu0 0.0
    %632 = vmatprep.subr.mxu0 0.0
    %633 = vmatpush1.msra.mxu0 0.0
    %634 = vmatprep.subr.mxu0 0.0
    %635 = vmatpush1.msra.mxu0 0.0
    %636 = vmatprep.subr.mxu0 0.0
    %637 = vmatpush1.msra.mxu0 0.0
    %638 = vmatprep.subr.mxu0 0.0
    %639 = vmatpush1.msra.mxu0 0.0
    %640 = vmatprep.subr.mxu0 0.0
    %641 = vmatpush1.msra.mxu0 0.0
    %642 = vmatprep.subr.mxu0 0.0
    %643 = vmatpush1.msra.mxu0 0.0
    %644 = vmatprep.subr.mxu0 0.0
    %645 = vmatpush1.msra.mxu0 0.0
    %646 = vmatprep.mubr.f32.mxu0 0.0
    %647 = vmatmul.mubr.f32.gmra.mrb[0].mxu0 %v442
    %v648 = vpop.f32.mrb[0].mxu0
    %v649 = vadd.f32 0.0, %v648
    %v650 = vpop.f32.mrb[0].mxu0
    %v651 = vadd.f32 0.0, %v650
    %652 = vdwg.mxu0
    %v653 = vadd.f32 %v443, %v578
    %v654 = vadd.f32 %v444, %v580
    %v655 = vadd.f32 %v445, %v649
    %v656 = vadd.f32 %v446, %v651
    %v657 = vtanh.pop %v653
    %v658 = vtanh.pop %v654
    %v659 = vtanh.pop %v655
    %v660 = vtanh.pop %v656
    %v661 = vadd.f32 %v657, 1.0
    %v662 = vmul.f32 %v661, 0.5
    %v663 = vadd.f32 %v658, 1.0
    %v664 = vmul.f32 %v663, 0.5
    %v665 = vadd.f32 %v660, 1.0
    %v666 = vmul.f32 %v665, 0.5
    %v667 = vld [vmem:[#allocation4] sm:$0xff]
    %v668 = vmul.f32 %v664, %v667
    %v669 = vmul.f32 %v662, %v659
    %v670 = vadd.f32 %v668, %v669
    %671 = vst [vmem:[#allocation4] sm:$0xff] %v670
    %v672 = vld [vmem:[#allocation4] sm:$0xff]
    %v673 = vtanh.pop %v672
    %v674 = vmul.f32 %v666, %v673
    %675 = vst [vmem:[#allocation3] sm:$0xff] %v674
    %v676 = vld [vmem:[#allocation3] sm:$0xff]
    %v677 = vld [vmem:[%s1] sm:$0xff]
    %v678 = vadd.f32 %v676, %v677
    %v679 = vld [vmem:[%s0] sm:$0xff]
    %680 = vmatprep.subr.mxu0 0.0
    %681 = vmatpush1.xpose.msra.mxu0 %v679
    %682 = vmatprep.subr.mxu0 0.0
    %683 = vmatpush1.xpose.msra.mxu0 0.0
    %684 = vmatprep.subr.mxu0 0.0
    %685 = vmatpush1.xpose.msra.mxu0 0.0
    %686 = vmatprep.subr.mxu0 0.0
    %687 = vmatpush1.xpose.msra.mxu0 0.0
    %688 = vmatprep.subr.mxu0 0.0
    %689 = vmatpush1.xpose.msra.mxu0 0.0
    %690 = vmatprep.subr.mxu0 0.0
    %691 = vmatpush1.xpose.msra.mxu0 0.0
    %692 = vmatprep.subr.mxu0 0.0
    %693 = vmatpush1.xpose.msra.mxu0 0.0
    %694 = vmatprep.subr.mxu0 0.0
    %695 = vmatpush1.xpose.msra.mxu0 0.0
    %696 = vmatprep.subr.mxu0 0.0
    %697 = vmatpush1.xpose.msra.mxu0 0.0
    %698 = vmatprep.subr.mxu0 0.0
    %699 = vmatpush1.xpose.msra.mxu0 0.0
    %700 = vmatprep.subr.mxu0 0.0
    %701 = vmatpush1.xpose.msra.mxu0 0.0
    %702 = vmatprep.subr.mxu0 0.0
    %703 = vmatpush1.xpose.msra.mxu0 0.0
    %704 = vmatprep.subr.mxu0 0.0
    %705 = vmatpush1.xpose.msra.mxu0 0.0
    %706 = vmatprep.subr.mxu0 0.0
    %707 = vmatpush1.xpose.msra.mxu0 0.0
    %708 = vmatprep.subr.mxu0 0.0
    %709 = vmatpush1.xpose.msra.mxu0 0.0
    %710 = vmatprep.subr.mxu0 0.0
    %711 = vmatpush1.xpose.msra.mxu0 0.0
    %712 = vmatprep.subr.mxu0 0.0
    %713 = vmatpush1.xpose.msra.mxu0 0.0
    %714 = vmatprep.subr.mxu0 0.0
    %715 = vmatpush1.xpose.msra.mxu0 0.0
    %716 = vmatprep.subr.mxu0 0.0
    %717 = vmatpush1.xpose.msra.mxu0 0.0
    %718 = vmatprep.subr.mxu0 0.0
    %719 = vmatpush1.xpose.msra.mxu0 0.0
    %720 = vmatprep.subr.mxu0 0.0
    %721 = vmatpush1.xpose.msra.mxu0 0.0
    %722 = vmatprep.subr.mxu0 0.0
    %723 = vmatpush1.xpose.msra.mxu0 0.0
    %724 = vmatprep.subr.mxu0 0.0
    %725 = vmatpush1.xpose.msra.mxu0 0.0
    %726 = vmatprep.subr.mxu0 0.0
    %727 = vmatpush1.xpose.msra.mxu0 0.0
    %728 = vmatprep.subr.mxu0 0.0
    %729 = vmatpush1.xpose.msra.mxu0 0.0
    %730 = vmatprep.subr.mxu0 0.0
    %731 = vmatpush1.xpose.msra.mxu0 0.0
    %732 = vmatprep.subr.mxu0 0.0
    %733 = vmatpush1.xpose.msra.mxu0 0.0
    %734 = vmatprep.subr.mxu0 0.0
    %735 = vmatpush1.xpose.msra.mxu0 0.0
    %736 = vmatprep.subr.mxu0 0.0
    %737 = vmatpush1.xpose.msra.mxu0 0.0
    %738 = vmatprep.subr.mxu0 0.0
    %739 = vmatpush1.xpose.msra.mxu0 0.0
    %740 = vmatprep.subr.mxu0 0.0
    %741 = vmatpush1.xpose.msra.mxu0 0.0
    %742 = vmatprep.subr.mxu0 0.0
    %743 = vmatpush1.xpose.msra.mxu0 0.0
    %744 = vmatprep.mubr.f32.mxu0 0.0
    %745 = vmatmul.mubr.f32.gmra.mrb[0].mxu0 %v678
    %v746 = vpop.f32.mrb[0].mxu0
    %v747 = vadd.f32 0.0, %v746
    %v748 = vpop.f32.mrb[0].mxu0
    %749 = vdwg.mxu0
    %v750 = vsel %vm357, %v747, -inf
    %751 = vmax.xlane.f32.xlu0 %v750
    %v752 = vpop.xlane.xlu0 %751
    %v753 = vsub.f32 %v747, %v752
    %v754 = vmul.f32 %v753, 1.442695
    %v755 = vpow.pop %v754
    %v756 = vsel %vm357, %v755, 0.0
    %757 = vadd.xlane.f32.xlu0 %v756
    %v758 = vpop.xlane.xlu0 %757
    %v759 = vrcp.pop %v758
    %v760 = vmul.f32 %v755, %v759
    %v762 = vsel %vm357, %v760, 0
    %764 = vmatprep.subr.mxu0 0.0
    %765 = vmatpush1.msra.mxu0 %v679
    %766 = vmatprep.subr.mxu0 0.0
    %767 = vmatpush1.msra.mxu0 0.0
    %768 = vmatprep.subr.mxu0 0.0
    %769 = vmatpush1.msra.mxu0 0.0
    %770 = vmatprep.subr.mxu0 0.0
    %771 = vmatpush1.msra.mxu0 0.0
    %772 = vmatprep.subr.mxu0 0.0
    %773 = vmatpush1.msra.mxu0 0.0
    %774 = vmatprep.subr.mxu0 0.0
    %775 = vmatpush1.msra.mxu0 0.0
    %776 = vmatprep.subr.mxu0 0.0
    %777 = vmatpush1.msra.mxu0 0.0
    %778 = vmatprep.subr.mxu0 0.0
    %779 = vmatpush1.msra.mxu0 0.0
    %780 = vmatprep.subr.mxu0 0.0
    %781 = vmatpush1.msra.mxu0 0.0
    %782 = vmatprep.subr.mxu0 0.0
    %783 = vmatpush1.msra.mxu0 0.0
    %784 = vmatprep.subr.mxu0 0.0
    %785 = vmatpush1.msra.mxu0 0.0
    %786 = vmatprep.subr.mxu0 0.0
    %787 = vmatpush1.msra.mxu0 0.0
    %788 = vmatprep.subr.mxu0 0.0
    %789 = vmatpush1.msra.mxu0 0.0
    %790 = vmatprep.subr.mxu0 0.0
    %791 = vmatpush1.msra.mxu0 0.0
    %792 = vmatprep.subr.mxu0 0.0
    %793 = vmatpush1.msra.mxu0 0.0
    %794 = vmatprep.subr.mxu0 0.0
    %795 = vmatpush1.msra.mxu0 0.0
    %796 = vmatprep.subr.mxu0 0.0
    %797 = vmatpush1.msra.mxu0 0.0
    %798 = vmatprep.subr.mxu0 0.0
    %799 = vmatpush1.msra.mxu0 0.0
    %800 = vmatprep.subr.mxu0 0.0
    %801 = vmatpush1.msra.mxu0 0.0
    %802 = vmatprep.subr.mxu0 0.0
    %803 = vmatpush1.msra.mxu0 0.0
    %804 = vmatprep.subr.mxu0 0.0
    %805 = vmatpush1.msra.mxu0 0.0
    %806 = vmatprep.subr.mxu0 0.0
    %807 = vmatpush1.msra.mxu0 0.0
    %808 = vmatprep.subr.mxu0 0.0
    %809 = vmatpush1.msra.mxu0 0.0
    %810 = vmatprep.subr.mxu0 0.0
    %811 = vmatpush1.msra.mxu0 0.0
    %812 = vmatprep.subr.mxu0 0.0
    %813 = vmatpush1.msra.mxu0 0.0
    %814 = vmatprep.subr.mxu0 0.0
    %815 = vmatpush1.msra.mxu0 0.0
    %816 = vmatprep.subr.mxu0 0.0
    %817 = vmatpush1.msra.mxu0 0.0
    %818 = vmatprep.subr.mxu0 0.0
    %819 = vmatpush1.msra.mxu0 0.0
    %820 = vmatprep.subr.mxu0 0.0
    %821 = vmatpush1.msra.mxu0 0.0
    %822 = vmatprep.subr.mxu0 0.0
    %823 = vmatpush1.msra.mxu0 0.0
    %824 = vmatprep.subr.mxu0 0.0
    %825 = vmatpush1.msra.mxu0 0.0
    %826 = vmatprep.subr.mxu0 0.0
    %827 = vmatpush1.msra.mxu0 0.0
    %828 = vmatprep.mubr.f32.mxu0 0.0
    %829 = vmatmul.mubr.f32.gmra.mrb[0].mxu0 %v762
    %v830 = vpop.f32.mrb[0].mxu0
    %v831 = vadd.f32 0.0, %v830
    %v832 = vpop.f32.mrb[0].mxu0
    %833 = vdwg.mxu0
    %v834 = vadd.f32 %v678, %v831
    %v835 = vld [vmem:[#allocation2] sm:$0xff]
    %v836 = vld [vmem:[#allocation2 + $0x8] sm:$0xff]
    %v837 = vld [vmem:[#allocation2 + $0x10] sm:$0xff]
    %v838 = vld [vmem:[#allocation2 + $0x18] sm:$0xff]
    %v839 = vld [vmem:[#allocation7] sm:$0xff]
    %v840 = vld [vmem:[#allocation7 + $0x8] sm:$0xff]
    %v841 = vld [vmem:[#allocation7 + $0x10] sm:$0xff]
    %v842 = vld [vmem:[#allocation7 + $0x18] sm:$0xff]
    %v843 = vld [vmem:[#allocation7 + $0x20] sm:$0xff]
    %v844 = vld [vmem:[#allocation7 + $0x28] sm:$0xff]
    %v845 = vld [vmem:[#allocation7 + $0x30] sm:$0xff]
    %v846 = vld [vmem:[#allocation7 + $0x38] sm:$0xff]
    %v847 = vld [vmem:[#allocation7 + $0x40] sm:$0xff]
    %v848 = vld [vmem:[#allocation7 + $0x48] sm:$0xff]
    %v849 = vld [vmem:[#allocation7 + $0x50] sm:$0xff]
    %v850 = vld [vmem:[#allocation7 + $0x58] sm:$0xff]
    %v851 = vld [vmem:[#allocation7 + $0x60] sm:$0xff]
    %v852 = vld [vmem:[#allocation7 + $0x68] sm:$0xff]
    %v853 = vld [vmem:[#allocation7 + $0x70] sm:$0xff]
    %v854 = vld [vmem:[#allocation7 + $0x78] sm:$0xff]
    %v855 = vld [vmem:[#allocation7 + $0x80] sm:$0xff]
    %v856 = vld [vmem:[#allocation7 + $0x88] sm:$0xff]
    %v857 = vld [vmem:[#allocation7 + $0x90] sm:$0xff]
    %v858 = vld [vmem:[#allocation7 + $0x98] sm:$0xff]
    %v859 = vld [vmem:[#allocation7 + $0xa0] sm:$0xff]
    %v860 = vld [vmem:[#allocation7 + $0xa8] sm:$0xff]
    %v861 = vld [vmem:[#allocation7 + $0xb0] sm:$0xff]
    %v862 = vld [vmem:[#allocation7 + $0xb8] sm:$0xff]
    %v863 = vld [vmem:[#allocation7 + $0xc0] sm:$0xff]
    %v864 = vld [vmem:[#allocation7 + $0xc8] sm:$0xff]
    %v865 = vld [vmem:[#allocation7 + $0xd0] sm:$0xff]
    %v866 = vld [vmem:[#allocation7 + $0xd8] sm:$0xff]
    %v867 = vld [vmem:[#allocation7 + $0xe0] sm:$0xff]
    %v868 = vld [vmem:[#allocation7 + $0xe8] sm:$0xff]
    %v869 = vld [vmem:[#allocation7 + $0xf0] sm:$0xff]
    %v870 = vld [vmem:[#allocation7 + $0xf8] sm:$0xff]
    %v871 = vld [vmem:[#allocation7 + $0x100] sm:$0xff]
    %v872 = vld [vmem:[#allocation7 + $0x108] sm:$0xff]
    %v873 = vld [vmem:[#allocation7 + $0x110] sm:$0xff]
    %v874 = vld [vmem:[#allocation7 + $0x118] sm:$0xff]
    %v875 = vld [vmem:[#allocation7 + $0x120] sm:$0xff]
    %v876 = vld [vmem:[#allocation7 + $0x128] sm:$0xff]
    %v877 = vld [vmem:[#allocation7 + $0x130] sm:$0xff]
    %v878 = vld [vmem:[#allocation7 + $0x138] sm:$0xff]
    %v879 = vld [vmem:[#allocation7 + $0x140] sm:$0xff]
    %v880 = vld [vmem:[#allocation7 + $0x148] sm:$0xff]
    %v881 = vld [vmem:[#allocation7 + $0x150] sm:$0xff]
    %v882 = vld [vmem:[#allocation7 + $0x158] sm:$0xff]
    %v883 = vld [vmem:[#allocation7 + $0x160] sm:$0xff]
    %v884 = vld [vmem:[#allocation7 + $0x168] sm:$0xff]
    %v885 = vld [vmem:[#allocation7 + $0x170] sm:$0xff]
    %v886 = vld [vmem:[#allocation7 + $0x178] sm:$0xff]
    %v887 = vld [vmem:[#allocation7 + $0x180] sm:$0xff]
    %v888 = vld [vmem:[#allocation7 + $0x188] sm:$0xff]
    %v889 = vld [vmem:[#allocation7 + $0x190] sm:$0xff]
    %v890 = vld [vmem:[#allocation7 + $0x198] sm:$0xff]
    %v891 = vld [vmem:[#allocation7 + $0x1a0] sm:$0xff]
    %v892 = vld [vmem:[#allocation7 + $0x1a8] sm:$0xff]
    %v893 = vld [vmem:[#allocation7 + $0x1b0] sm:$0xff]
    %v894 = vld [vmem:[#allocation7 + $0x1b8] sm:$0xff]
    %v895 = vld [vmem:[#allocation7 + $0x1c0] sm:$0xff]
    %v896 = vld [vmem:[#allocation7 + $0x1c8] sm:$0xff]
    %v897 = vld [vmem:[#allocation7 + $0x1d0] sm:$0xff]
    %v898 = vld [vmem:[#allocation7 + $0x1d8] sm:$0xff]
    %v899 = vld [vmem:[#allocation7 + $0x1e0] sm:$0xff]
    %v900 = vld [vmem:[#allocation7 + $0x1e8] sm:$0xff]
    %v901 = vld [vmem:[#allocation7 + $0x1f0] sm:$0xff]
    %v902 = vld [vmem:[#allocation7 + $0x1f8] sm:$0xff]
    %903 = vmatprep.subr.mxu0 %v840
    %904 = vmatpush1.msra.mxu0 %v839
    %905 = vmatprep.subr.mxu0 %v844
    %906 = vmatpush1.msra.mxu0 %v843
    %907 = vmatprep.subr.mxu0 %v848
    %908 = vmatpush1.msra.mxu0 %v847
    %909 = vmatprep.subr.mxu0 %v852
    %910 = vmatpush1.msra.mxu0 %v851
    %911 = vmatprep.subr.mxu0 %v856
    %912 = vmatpush1.msra.mxu0 %v855
    %913 = vmatprep.subr.mxu0 %v860
    %914 = vmatpush1.msra.mxu0 %v859
    %915 = vmatprep.subr.mxu0 %v864
    %916 = vmatpush1.msra.mxu0 %v863
    %917 = vmatprep.subr.mxu0 %v868
    %918 = vmatpush1.msra.mxu0 %v867
    %919 = vmatprep.subr.mxu0 %v872
    %920 = vmatpush1.msra.mxu0 %v871
    %921 = vmatprep.subr.mxu0 %v876
    %922 = vmatpush1.msra.mxu0 %v875
    %923 = vmatprep.subr.mxu0 %v880
    %924 = vmatpush1.msra.mxu0 %v879
    %925 = vmatprep.subr.mxu0 %v884
    %926 = vmatpush1.msra.mxu0 %v883
    %927 = vmatprep.subr.mxu0 %v888
    %928 = vmatpush1.msra.mxu0 %v887
    %929 = vmatprep.subr.mxu0 %v892
    %930 = vmatpush1.msra.mxu0 %v891
    %931 = vmatprep.subr.mxu0 %v896
    %932 = vmatpush1.msra.mxu0 %v895
    %933 = vmatprep.subr.mxu0 %v900
    %934 = vmatpush1.msra.mxu0 %v899
    %935 = vmatprep.subr.mxu0 0.0
    %936 = vmatpush1.msra.mxu0 0.0
    %937 = vmatprep.subr.mxu0 0.0
    %938 = vmatpush1.msra.mxu0 0.0
    %939 = vmatprep.subr.mxu0 0.0
    %940 = vmatpush1.msra.mxu0 0.0
    %941 = vmatprep.subr.mxu0 0.0
    %942 = vmatpush1.msra.mxu0 0.0
    %943 = vmatprep.subr.mxu0 0.0
    %944 = vmatpush1.msra.mxu0 0.0
    %945 = vmatprep.subr.mxu0 0.0
    %946 = vmatpush1.msra.mxu0 0.0
    %947 = vmatprep.subr.mxu0 0.0
    %948 = vmatpush1.msra.mxu0 0.0
    %949 = vmatprep.subr.mxu0 0.0
    %950 = vmatpush1.msra.mxu0 0.0
    %951 = vmatprep.subr.mxu0 0.0
    %952 = vmatpush1.msra.mxu0 0.0
    %953 = vmatprep.subr.mxu0 0.0
    %954 = vmatpush1.msra.mxu0 0.0
    %955 = vmatprep.subr.mxu0 0.0
    %956 = vmatpush1.msra.mxu0 0.0
    %957 = vmatprep.subr.mxu0 0.0
    %958 = vmatpush1.msra.mxu0 0.0
    %959 = vmatprep.subr.mxu0 0.0
    %960 = vmatpush1.msra.mxu0 0.0
    %961 = vmatprep.subr.mxu0 0.0
    %962 = vmatpush1.msra.mxu0 0.0
    %963 = vmatprep.subr.mxu0 0.0
    %964 = vmatpush1.msra.mxu0 0.0
    %965 = vmatprep.subr.mxu0 0.0
    %966 = vmatpush1.msra.mxu0 0.0
    %967 = vmatprep.mubr.f32.mxu0 0.0
    %968 = vmatmul.mubr.f32.gmra.mrb[0].mxu0 %v834
    %v969 = vpop.f32.mrb[0].mxu0
    %v970 = vadd.f32 0.0, %v969
    %v971 = vpop.f32.mrb[0].mxu0
    %v972 = vadd.f32 0.0, %v971
    %973 = vdwg.mxu0
    %974 = vmatprep.subr.mxu0 %v842
    %975 = vmatpush1.msra.mxu0 %v841
    %976 = vmatprep.subr.mxu0 %v846
    %977 = vmatpush1.msra.mxu0 %v845
    %978 = vmatprep.subr.mxu0 %v850
    %979 = vmatpush1.msra.mxu0 %v849
    %980 = vmatprep.subr.mxu0 %v854
    %981 = vmatpush1.msra.mxu0 %v853
    %982 = vmatprep.subr.mxu0 %v858
    %983 = vmatpush1.msra.mxu0 %v857
    %984 = vmatprep.subr.mxu0 %v862
    %985 = vmatpush1.msra.mxu0 %v861
    %986 = vmatprep.subr.mxu0 %v866
    %987 = vmatpush1.msra.mxu0 %v865
    %988 = vmatprep.subr.mxu0 %v870
    %989 = vmatpush1.msra.mxu0 %v869
    %990 = vmatprep.subr.mxu0 %v874
    %991 = vmatpush1.msra.mxu0 %v873
    %992 = vmatprep.subr.mxu0 %v878
    %993 = vmatpush1.msra.mxu0 %v877
    %994 = vmatprep.subr.mxu0 %v882
    %995 = vmatpush1.msra.mxu0 %v881
    %996 = vmatprep.subr.mxu0 %v886
    %997 = vmatpush1.msra.mxu0 %v885
    %998 = vmatprep.subr.mxu0 %v890
    %999 = vmatpush1.msra.mxu0 %v889
    %1000 = vmatprep.subr.mxu0 %v894
    %1001 = vmatpush1.msra.mxu0 %v893
    %1002 = vmatprep.subr.mxu0 %v898
    %1003 = vmatpush1.msra.mxu0 %v897
    %1004 = vmatprep.subr.mxu0 %v902
    %1005 = vmatpush1.msra.mxu0 %v901
    %1006 = vmatprep.subr.mxu0 0.0
    %1007 = vmatpush1.msra.mxu0 0.0
    %1008 = vmatprep.subr.mxu0 0.0
    %1009 = vmatpush1.msra.mxu0 0.0
    %1010 = vmatprep.subr.mxu0 0.0
    %1011 = vmatpush1.msra.mxu0 0.0
    %1012 = vmatprep.subr.mxu0 0.0
    %1013 = vmatpush1.msra.mxu0 0.0
    %1014 = vmatprep.subr.mxu0 0.0
    %1015 = vmatpush1.msra.mxu0 0.0
    %1016 = vmatprep.subr.mxu0 0.0
    %1017 = vmatpush1.msra.mxu0 0.0
    %1018 = vmatprep.subr.mxu0 0.0
    %1019 = vmatpush1.msra.mxu0 0.0
    %1020 = vmatprep.subr.mxu0 0.0
    %1021 = vmatpush1.msra.mxu0 0.0
    %1022 = vmatprep.subr.mxu0 0.0
    %1023 = vmatpush1.msra.mxu0 0.0
    %1024 = vmatprep.subr.mxu0 0.0
    %1025 = vmatpush1.msra.mxu0 0.0
    %1026 = vmatprep.subr.mxu0 0.0
    %1027 = vmatpush1.msra.mxu0 0.0
    %1028 = vmatprep.subr.mxu0 0.0
    %1029 = vmatpush1.msra.mxu0 0.0
    %1030 = vmatprep.subr.mxu0 0.0
    %1031 = vmatpush1.msra.mxu0 0.0
    %1032 = vmatprep.subr.mxu0 0.0
    %1033 = vmatpush1.msra.mxu0 0.0
    %1034 = vmatprep.subr.mxu0 0.0
    %1035 = vmatpush1.msra.mxu0 0.0
    %1036 = vmatprep.subr.mxu0 0.0
    %1037 = vmatpush1.msra.mxu0 0.0
    %1038 = vmatprep.mubr.f32.mxu0 0.0
    %1039 = vmatmul.mubr.f32.gmra.mrb[0].mxu0 %v834
    %v1040 = vpop.f32.mrb[0].mxu0
    %v1041 = vadd.f32 0.0, %v1040
    %v1042 = vpop.f32.mrb[0].mxu0
    %v1043 = vadd.f32 0.0, %v1042
    %1044 = vdwg.mxu0
    %v1045 = vadd.f32 %v835, %v970
    %v1046 = vadd.f32 %v836, %v972
    %v1047 = vadd.f32 %v837, %v1041
    %v1048 = vadd.f32 %v838, %v1043
    %v1049 = vtanh.pop %v1045
    %v1050 = vtanh.pop %v1046
    %v1051 = vtanh.pop %v1047
    %v1052 = vtanh.pop %v1048
    %v1053 = vadd.f32 %v1049, 1.0
    %v1054 = vmul.f32 %v1053, 0.5
    %v1055 = vadd.f32 %v1050, 1.0
    %v1056 = vmul.f32 %v1055, 0.5
    %v1057 = vadd.f32 %v1052, 1.0
    %v1058 = vmul.f32 %v1057, 0.5
    %v1059 = vld [vmem:[#allocation4] sm:$0xff]
    %v1060 = vmul.f32 %v1056, %v1059
    %v1061 = vmul.f32 %v1054, %v1051
    %v1062 = vadd.f32 %v1060, %v1061
    %1063 = vst [vmem:[#allocation4] sm:$0xff] %v1062
    %v1064 = vld [vmem:[#allocation4] sm:$0xff]
    %v1065 = vtanh.pop %v1064
    %v1066 = vmul.f32 %v1058, %v1065
    %1067 = vst [vmem:[#allocation3] sm:$0xff] %v1066
    %v1068 = vld [vmem:[#allocation3] sm:$0xff]
    %v1069 = vld [vmem:[%s1] sm:$0xff]
    %v1070 = vadd.f32 %v1068, %v1069
    %v1071 = vld [vmem:[%s0] sm:$0xff]
    %1072 = vmatprep.subr.mxu0 0.0
    %1073 = vmatpush1.xpose.msra.mxu0 %v1071
    %1074 = vmatprep.subr.mxu0 0.0
    %1075 = vmatpush1.xpose.msra.mxu0 0.0
    %1076 = vmatprep.subr.mxu0 0.0
    %1077 = vmatpush1.xpose.msra.mxu0 0.0
    %1078 = vmatprep.subr.mxu0 0.0
    %1079 = vmatpush1.xpose.msra.mxu0 0.0
    %1080 = vmatprep.subr.mxu0 0.0
    %1081 = vmatpush1.xpose.msra.mxu0 0.0
    %1082 = vmatprep.subr.mxu0 0.0
    %1083 = vmatpush1.xpose.msra.mxu0 0.0
    %1084 = vmatprep.subr.mxu0 0.0
    %1085 = vmatpush1.xpose.msra.mxu0 0.0
    %1086 = vmatprep.subr.mxu0 0.0
    %1087 = vmatpush1.xpose.msra.mxu0 0.0
    %1088 = vmatprep.subr.mxu0 0.0
    %1089 = vmatpush1.xpose.msra.mxu0 0.0
    %1090 = vmatprep.subr.mxu0 0.0
    %1091 = vmatpush1.xpose.msra.mxu0 0.0
    %1092 = vmatprep.subr.mxu0 0.0
    %1093 = vmatpush1.xpose.msra.mxu0 0.0
    %1094 = vmatprep.subr.mxu0 0.0
    %1095 = vmatpush1.xpose.msra.mxu0 0.0
    %1096 = vmatprep.subr.mxu0 0.0
    %1097 = vmatpush1.xpose.msra.mxu0 0.0
    %1098 = vmatprep.subr.mxu0 0.0
    %1099 = vmatpush1.xpose.msra.mxu0 0.0
    %1100 = vmatprep.subr.mxu0 0.0
    %1101 = vmatpush1.xpose.msra.mxu0 0.0
    %1102 = vmatprep.subr.mxu0 0.0
    %1103 = vmatpush1.xpose.msra.mxu0 0.0
    %1104 = vmatprep.subr.mxu0 0.0
    %1105 = vmatpush1.xpose.msra.mxu0 0.0
    %1106 = vmatprep.subr.mxu0 0.0
    %1107 = vmatpush1.xpose.msra.mxu0 0.0
    %1108 = vmatprep.subr.mxu0 0.0
    %1109 = vmatpush1.xpose.msra.mxu0 0.0
    %1110 = vmatprep.subr.mxu0 0.0
    %1111 = vmatpush1.xpose.msra.mxu0 0.0
    %1112 = vmatprep.subr.mxu0 0.0
    %1113 = vmatpush1.xpose.msra.mxu0 0.0
    %1114 = vmatprep.subr.mxu0 0.0
    %1115 = vmatpush1.xpose.msra.mxu0 0.0
    %1116 = vmatprep.subr.mxu0 0.0
    %1117 = vmatpush1.xpose.msra.mxu0 0.0
    %1118 = vmatprep.subr.mxu0 0.0
    %1119 = vmatpush1.xpose.msra.mxu0 0.0
    %1120 = vmatprep.subr.mxu0 0.0
    %1121 = vmatpush1.xpose.msra.mxu0 0.0
    %1122 = vmatprep.subr.mxu0 0.0
    %1123 = vmatpush1.xpose.msra.mxu0 0.0
    %1124 = vmatprep.subr.mxu0 0.0
    %1125 = vmatpush1.xpose.msra.mxu0 0.0
    %1126 = vmatprep.subr.mxu0 0.0
    %1127 = vmatpush1.xpose.msra.mxu0 0.0
    %1128 = vmatprep.subr.mxu0 0.0
    %1129 = vmatpush1.xpose.msra.mxu0 0.0
    %1130 = vmatprep.subr.mxu0 0.0
    %1131 = vmatpush1.xpose.msra.mxu0 0.0
    %1132 = vmatprep.subr.mxu0 0.0
    %1133 = vmatpush1.xpose.msra.mxu0 0.0
    %1134 = vmatprep.subr.mxu0 0.0
    %1135 = vmatpush1.xpose.msra.mxu0 0.0
    %1136 = vmatprep.mubr.f32.mxu0 0.0
    %1137 = vmatmul.mubr.f32.gmra.mrb[0].mxu0 %v1070
    %v1138 = vpop.f32.mrb[0].mxu0
    %v1139 = vadd.f32 0.0, %v1138
    %v1140 = vpop.f32.mrb[0].mxu0
    %1141 = vdwg.mxu0
    %v1142 = vsel %vm357, %v1139, -inf
    %1143 = vmax.xlane.f32.xlu0 %v1142
    %v1144 = vpop.xlane.xlu0 %1143
    %v1145 = vsub.f32 %v1139, %v1144
    %v1146 = vmul.f32 %v1145, 1.442695
    %v1147 = vpow.pop %v1146
    %v1148 = vsel %vm357, %v1147, 0.0
    %1149 = vadd.xlane.f32.xlu0 %v1148
    %v1150 = vpop.xlane.xlu0 %1149
    %v1151 = vrcp.pop %v1150
    %v1152 = vmul.f32 %v1147, %v1151
    %v1154 = vsel %vm357, %v1152, 0
    %1156 = vmatprep.subr.mxu0 0.0
    %1157 = vmatpush1.msra.mxu0 %v1071
    %1158 = vmatprep.subr.mxu0 0.0
    %1159 = vmatpush1.msra.mxu0 0.0
    %1160 = vmatprep.subr.mxu0 0.0
    %1161 = vmatpush1.msra.mxu0 0.0
    %1162 = vmatprep.subr.mxu0 0.0
    %1163 = vmatpush1.msra.mxu0 0.0
    %1164 = vmatprep.subr.mxu0 0.0
    %1165 = vmatpush1.msra.mxu0 0.0
    %1166 = vmatprep.subr.mxu0 0.0
    %1167 = vmatpush1.msra.mxu0 0.0
    %1168 = vmatprep.subr.mxu0 0.0
    %1169 = vmatpush1.msra.mxu0 0.0
    %1170 = vmatprep.subr.mxu0 0.0
    %1171 = vmatpush1.msra.mxu0 0.0
    %1172 = vmatprep.subr.mxu0 0.0
    %1173 = vmatpush1.msra.mxu0 0.0
    %1174 = vmatprep.subr.mxu0 0.0
    %1175 = vmatpush1.msra.mxu0 0.0
    %1176 = vmatprep.subr.mxu0 0.0
    %1177 = vmatpush1.msra.mxu0 0.0
    %1178 = vmatprep.subr.mxu0 0.0
    %1179 = vmatpush1.msra.mxu0 0.0
    %1180 = vmatprep.subr.mxu0 0.0
    %1181 = vmatpush1.msra.mxu0 0.0
    %1182 = vmatprep.subr.mxu0 0.0
    %1183 = vmatpush1.msra.mxu0 0.0
    %1184 = vmatprep.subr.mxu0 0.0
    %1185 = vmatpush1.msra.mxu0 0.0
    %1186 = vmatprep.subr.mxu0 0.0
    %1187 = vmatpush1.msra.mxu0 0.0
    %1188 = vmatprep.subr.mxu0 0.0
    %1189 = vmatpush1.msra.mxu0 0.0
    %1190 = vmatprep.subr.mxu0 0.0
    %1191 = vmatpush1.msra.mxu0 0.0
    %1192 = vmatprep.subr.mxu0 0.0
    %1193 = vmatpush1.msra.mxu0 0.0
    %1194 = vmatprep.subr.mxu0 0.0
    %1195 = vmatpush1.msra.mxu0 0.0
    %1196 = vmatprep.subr.mxu0 0.0
    %1197 = vmatpush1.msra.mxu0 0.0
    %1198 = vmatprep.subr.mxu0 0.0
    %1199 = vmatpush1.msra.mxu0 0.0
    %1200 = vmatprep.subr.mxu0 0.0
    %1201 = vmatpush1.msra.mxu0 0.0
    %1202 = vmatprep.subr.mxu0 0.0
    %1203 = vmatpush1.msra.mxu0 0.0
    %1204 = vmatprep.subr.mxu0 0.0
    %1205 = vmatpush1.msra.mxu0 0.0
    %1206 = vmatprep.subr.mxu0 0.0
    %1207 = vmatpush1.msra.mxu0 0.0
    %1208 = vmatprep.subr.mxu0 0.0
    %1209 = vmatpush1.msra.mxu0 0.0
    %1210 = vmatprep.subr.mxu0 0.0
    %1211 = vmatpush1.msra.mxu0 0.0
    %1212 = vmatprep.subr.mxu0 0.0
    %1213 = vmatpush1.msra.mxu0 0.0
    %1214 = vmatprep.subr.mxu0 0.0
    %1215 = vmatpush1.msra.mxu0 0.0
    %1216 = vmatprep.subr.mxu0 0.0
    %1217 = vmatpush1.msra.mxu0 0.0
    %1218 = vmatprep.subr.mxu0 0.0
    %1219 = vmatpush1.msra.mxu0 0.0
    %1220 = vmatprep.mubr.f32.mxu0 0.0
    %1221 = vmatmul.mubr.f32.gmra.mrb[0].mxu0 %v1154
    %v1222 = vpop.f32.mrb[0].mxu0
    %v1223 = vadd.f32 0.0, %v1222
    %v1224 = vpop.f32.mrb[0].mxu0
    %1225 = vdwg.mxu0
    %v1226 = vadd.f32 %v1070, %v1223
    %v1227 = vld [vmem:[#allocation2] sm:$0xff]
    %v1228 = vld [vmem:[#allocation2 + $0x8] sm:$0xff]
    %v1229 = vld [vmem:[#allocation2 + $0x10] sm:$0xff]
    %v1230 = vld [vmem:[#allocation2 + $0x18] sm:$0xff]
    %v1231 = vld [vmem:[#allocation7] sm:$0xff]
    %v1232 = vld [vmem:[#allocation7 + $0x8] sm:$0xff]
    %v1233 = vld [vmem:[#allocation7 + $0x10] sm:$0xff]
    %v1234 = vld [vmem:[#allocation7 + $0x18] sm:$0xff]
    %v1235 = vld [vmem:[#allocation7 + $0x20] sm:$0xff]
    %v1236 = vld [vmem:[#allocation7 + $0x28] sm:$0xff]
    %v1237 = vld [vmem:[#allocation7 + $0x30] sm:$0xff]
    %v1238 = vld [vmem:[#allocation7 + $0x38] sm:$0xff]
    %v1239 = vld [vmem:[#allocation7 + $0x40] sm:$0xff]
    %v1240 = vld [vmem:[#allocation7 + $0x48] sm:$0xff]
    %v1241 = vld [vmem:[#allocation7 + $0x50] sm:$0xff]
    %v1242 = vld [vmem:[#allocation7 + $0x58] sm:$0xff]
    %v1243 = vld [vmem:[#allocation7 + $0x60] sm:$0xff]
    %v1244 = vld [vmem:[#allocation7 + $0x68] sm:$0xff]
    %v1245 = vld [vmem:[#allocation7 + $0x70] sm:$0xff]
    %v1246 = vld [vmem:[#allocation7 + $0x78] sm:$0xff]
    %v1247 = vld [vmem:[#allocation7 + $0x80] sm:$0xff]
    %v1248 = vld [vmem:[#allocation7 + $0x88] sm:$0xff]
    %v1249 = vld [vmem:[#allocation7 + $0x90] sm:$0xff]
    %v1250 = vld [vmem:[#allocation7 + $0x98] sm:$0xff]
    %v1251 = vld [vmem:[#allocation7 + $0xa0] sm:$0xff]
    %v1252 = vld [vmem:[#allocation7 + $0xa8] sm:$0xff]
    %v1253 = vld [vmem:[#allocation7 + $0xb0] sm:$0xff]
    %v1254 = vld [vmem:[#allocation7 + $0xb8] sm:$0xff]
    %v1255 = vld [vmem:[#allocation7 + $0xc0] sm:$0xff]
    %v1256 = vld [vmem:[#allocation7 + $0xc8] sm:$0xff]
    %v1257 = vld [vmem:[#allocation7 + $0xd0] sm:$0xff]
    %v1258 = vld [vmem:[#allocation7 + $0xd8] sm:$0xff]
    %v1259 = vld [vmem:[#allocation7 + $0xe0] sm:$0xff]
    %v1260 = vld [vmem:[#allocation7 + $0xe8] sm:$0xff]
    %v1261 = vld [vmem:[#allocation7 + $0xf0] sm:$0xff]
    %v1262 = vld [vmem:[#allocation7 + $0xf8] sm:$0xff]
    %v1263 = vld [vmem:[#allocation7 + $0x100] sm:$0xff]
    %v1264 = vld [vmem:[#allocation7 + $0x108] sm:$0xff]
    %v1265 = vld [vmem:[#allocation7 + $0x110] sm:$0xff]
    %v1266 = vld [vmem:[#allocation7 + $0x118] sm:$0xff]
    %v1267 = vld [vmem:[#allocation7 + $0x120] sm:$0xff]
    %v1268 = vld [vmem:[#allocation7 + $0x128] sm:$0xff]
    %v1269 = vld [vmem:[#allocation7 + $0x130] sm:$0xff]
    %v1270 = vld [vmem:[#allocation7 + $0x138] sm:$0xff]
    %v1271 = vld [vmem:[#allocation7 + $0x140] sm:$0xff]
    %v1272 = vld [vmem:[#allocation7 + $0x148] sm:$0xff]
    %v1273 = vld [vmem:[#allocation7 + $0x150] sm:$0xff]
    %v1274 = vld [vmem:[#allocation7 + $0x158] sm:$0xff]
    %v1275 = vld [vmem:[#allocation7 + $0x160] sm:$0xff]
    %v1276 = vld [vmem:[#allocation7 + $0x168] sm:$0xff]
    %v1277 = vld [vmem:[#allocation7 + $0x170] sm:$0xff]
    %v1278 = vld [vmem:[#allocation7 + $0x178] sm:$0xff]
    %v1279 = vld [vmem:[#allocation7 + $0x180] sm:$0xff]
    %v1280 = vld [vmem:[#allocation7 + $0x188] sm:$0xff]
    %v1281 = vld [vmem:[#allocation7 + $0x190] sm:$0xff]
    %v1282 = vld [vmem:[#allocation7 + $0x198] sm:$0xff]
    %v1283 = vld [vmem:[#allocation7 + $0x1a0] sm:$0xff]
    %v1284 = vld [vmem:[#allocation7 + $0x1a8] sm:$0xff]
    %v1285 = vld [vmem:[#allocation7 + $0x1b0] sm:$0xff]
    %v1286 = vld [vmem:[#allocation7 + $0x1b8] sm:$0xff]
    %v1287 = vld [vmem:[#allocation7 + $0x1c0] sm:$0xff]
    %v1288 = vld [vmem:[#allocation7 + $0x1c8] sm:$0xff]
    %v1289 = vld [vmem:[#allocation7 + $0x1d0] sm:$0xff]
    %v1290 = vld [vmem:[#allocation7 + $0x1d8] sm:$0xff]
    %v1291 = vld [vmem:[#allocation7 + $0x1e0] sm:$0xff]
    %v1292 = vld [vmem:[#allocation7 + $0x1e8] sm:$0xff]
    %v1293 = vld [vmem:[#allocation7 + $0x1f0] sm:$0xff]
    %v1294 = vld [vmem:[#allocation7 + $0x1f8] sm:$0xff]
    %1295 = vmatprep.subr.mxu0 %v1232
    %1296 = vmatpush1.msra.mxu0 %v1231
    %1297 = vmatprep.subr.mxu0 %v1236
    %1298 = vmatpush1.msra.mxu0 %v1235
    %1299 = vmatprep.subr.mxu0 %v1240
    %1300 = vmatpush1.msra.mxu0 %v1239
    %1301 = vmatprep.subr.mxu0 %v1244
    %1302 = vmatpush1.msra.mxu0 %v1243
    %1303 = vmatprep.subr.mxu0 %v1248
    %1304 = vmatpush1.msra.mxu0 %v1247
    %1305 = vmatprep.subr.mxu0 %v1252
    %1306 = vmatpush1.msra.mxu0 %v1251
    %1307 = vmatprep.subr.mxu0 %v1256
    %1308 = vmatpush1.msra.mxu0 %v1255
    %1309 = vmatprep.subr.mxu0 %v1260
    %1310 = vmatpush1.msra.mxu0 %v1259
    %1311 = vmatprep.subr.mxu0 %v1264
    %1312 = vmatpush1.msra.mxu0 %v1263
    %1313 = vmatprep.subr.mxu0 %v1268
    %1314 = vmatpush1.msra.mxu0 %v1267
    %1315 = vmatprep.subr.mxu0 %v1272
    %1316 = vmatpush1.msra.mxu0 %v1271
    %1317 = vmatprep.subr.mxu0 %v1276
    %1318 = vmatpush1.msra.mxu0 %v1275
    %1319 = vmatprep.subr.mxu0 %v1280
    %1320 = vmatpush1.msra.mxu0 %v1279
    %1321 = vmatprep.subr.mxu0 %v1284
    %1322 = vmatpush1.msra.mxu0 %v1283
    %1323 = vmatprep.subr.mxu0 %v1288
    %1324 = vmatpush1.msra.mxu0 %v1287
    %1325 = vmatprep.subr.mxu0 %v1292
    %1326 = vmatpush1.msra.mxu0 %v1291
    %1327 = vmatprep.subr.mxu0 0.0
    %1328 = vmatpush1.msra.mxu0 0.0
    %1329 = vmatprep.subr.mxu0 0.0
    %1330 = vmatpush1.msra.mxu0 0.0
    %1331 = vmatprep.subr.mxu0 0.0
    %1332 = vmatpush1.msra.mxu0 0.0
    %1333 = vmatprep.subr.mxu0 0.0
    %1334 = vmatpush1.msra.mxu0 0.0
    %1335 = vmatprep.subr.mxu0 0.0
    %1336 = vmatpush1.msra.mxu0 0.0
    %1337 = vmatprep.subr.mxu0 0.0
    %1338 = vmatpush1.msra.mxu0 0.0
    %1339 = vmatprep.subr.mxu0 0.0
    %1340 = vmatpush1.msra.mxu0 0.0
    %1341 = vmatprep.subr.mxu0 0.0
    %1342 = vmatpush1.msra.mxu0 0.0
    %1343 = vmatprep.subr.mxu0 0.0
    %1344 = vmatpush1.msra.mxu0 0.0
    %1345 = vmatprep.subr.mxu0 0.0
    %1346 = vmatpush1.msra.mxu0 0.0
    %1347 = vmatprep.subr.mxu0 0.0
    %1348 = vmatpush1.msra.mxu0 0.0
    %1349 = vmatprep.subr.mxu0 0.0
    %1350 = vmatpush1.msra.mxu0 0.0
    %1351 = vmatprep.subr.mxu0 0.0
    %1352 = vmatpush1.msra.mxu0 0.0
    %1353 = vmatprep.subr.mxu0 0.0
    %1354 = vmatpush1.msra.mxu0 0.0
    %1355 = vmatprep.subr.mxu0 0.0
    %1356 = vmatpush1.msra.mxu0 0.0
    %1357 = vmatprep.subr.mxu0 0.0
    %1358 = vmatpush1.msra.mxu0 0.0
    %1359 = vmatprep.mubr.f32.mxu0 0.0
    %1360 = vmatmul.mubr.f32.gmra.mrb[0].mxu0 %v1226
    %v1361 = vpop.f32.mrb[0].mxu0
    %v1362 = vadd.f32 0.0, %v1361
    %v1363 = vpop.f32.mrb[0].mxu0
    %v1364 = vadd.f32 0.0, %v1363
    %1365 = vdwg.mxu0
    %1366 = vmatprep.subr.mxu0 %v1234
    %1367 = vmatpush1.msra.mxu0 %v1233
    %1368 = vmatprep.subr.mxu0 %v1238
    %1369 = vmatpush1.msra.mxu0 %v1237
    %1370 = vmatprep.subr.mxu0 %v1242
    %1371 = vmatpush1.msra.mxu0 %v1241
    %1372 = vmatprep.subr.mxu0 %v1246
    %1373 = vmatpush1.msra.mxu0 %v1245
    %1374 = vmatprep.subr.mxu0 %v1250
    %1375 = vmatpush1.msra.mxu0 %v1249
    %1376 = vmatprep.subr.mxu0 %v1254
    %1377 = vmatpush1.msra.mxu0 %v1253
    %1378 = vmatprep.subr.mxu0 %v1258
    %1379 = vmatpush1.msra.mxu0 %v1257
    %1380 = vmatprep.subr.mxu0 %v1262
    %1381 = vmatpush1.msra.mxu0 %v1261
    %1382 = vmatprep.subr.mxu0 %v1266
    %1383 = vmatpush1.msra.mxu0 %v1265
    %1384 = vmatprep.subr.mxu0 %v1270
    %1385 = vmatpush1.msra.mxu0 %v1269
    %1386 = vmatprep.subr.mxu0 %v1274
    %1387 = vmatpush1.msra.mxu0 %v1273
    %1388 = vmatprep.subr.mxu0 %v1278
    %1389 = vmatpush1.msra.mxu0 %v1277
    %1390 = vmatprep.subr.mxu0 %v1282
    %1391 = vmatpush1.msra.mxu0 %v1281
    %1392 = vmatprep.subr.mxu0 %v1286
    %1393 = vmatpush1.msra.mxu0 %v1285
    %1394 = vmatprep.subr.mxu0 %v1290
    %1395 = vmatpush1.msra.mxu0 %v1289
    %1396 = vmatprep.subr.mxu0 %v1294
    %1397 = vmatpush1.msra.mxu0 %v1293
    %1398 = vmatprep.subr.mxu0 0.0
    %1399 = vmatpush1.msra.mxu0 0.0
    %1400 = vmatprep.subr.mxu0 0.0
    %1401 = vmatpush1.msra.mxu0 0.0
    %1402 = vmatprep.subr.mxu0 0.0
    %1403 = vmatpush1.msra.mxu0 0.0
    %1404 = vmatprep.subr.mxu0 0.0
    %1405 = vmatpush1.msra.mxu0 0.0
    %1406 = vmatprep.subr.mxu0 0.0
    %1407 = vmatpush1.msra.mxu0 0.0
    %1408 = vmatprep.subr.mxu0 0.0
    %1409 = vmatpush1.msra.mxu0 0.0
    %1410 = vmatprep.subr.mxu0 0.0
    %1411 = vmatpush1.msra.mxu0 0.0
    %1412 = vmatprep.subr.mxu0 0.0
    %1413 = vmatpush1.msra.mxu0 0.0
    %1414 = vmatprep.subr.mxu0 0.0
    %1415 = vmatpush1.msra.mxu0 0.0
    %1416 = vmatprep.subr.mxu0 0.0
    %1417 = vmatpush1.msra.mxu0 0.0
    %1418 = vmatprep.subr.mxu0 0.0
    %1419 = vmatpush1.msra.mxu0 0.0
    %1420 = vmatprep.subr.mxu0 0.0
    %1421 = vmatpush1.msra.mxu0 0.0
    %1422 = vmatprep.subr.mxu0 0.0
    %1423 = vmatpush1.msra.mxu0 0.0
    %1424 = vmatprep.subr.mxu0 0.0
    %1425 = vmatpush1.msra.mxu0 0.0
    %1426 = vmatprep.subr.mxu0 0.0
    %1427 = vmatpush1.msra.mxu0 0.0
    %1428 = vmatprep.subr.mxu0 0.0
    %1429 = vmatpush1.msra.mxu0 0.0
    %1430 = vmatprep.mubr.f32.mxu0 0.0
    %1431 = vmatmul.mubr.f32.gmra.mrb[0].mxu0 %v1226
    %v1432 = vpop.f32.mrb[0].mxu0
    %v1433 = vadd.f32 0.0, %v1432
    %v1434 = vpop.f32.mrb[0].mxu0
    %v1435 = vadd.f32 0.0, %v1434
    %1436 = vdwg.mxu0
    %v1437 = vadd.f32 %v1227, %v1362
    %v1438 = vadd.f32 %v1228, %v1364
    %v1439 = vadd.f32 %v1229, %v1433
    %v1440 = vadd.f32 %v1230, %v1435
    %v1441 = vtanh.pop %v1437
    %v1442 = vtanh.pop %v1438
    %v1443 = vtanh.pop %v1439
    %v1444 = vtanh.pop %v1440
    %v1445 = vadd.f32 %v1441, 1.0
    %v1446 = vmul.f32 %v1445, 0.5
    %v1447 = vadd.f32 %v1442, 1.0
    %v1448 = vmul.f32 %v1447, 0.5
    %v1449 = vadd.f32 %v1444, 1.0
    %v1450 = vmul.f32 %v1449, 0.5
    %v1451 = vld [vmem:[#allocation4] sm:$0xff]
    %v1452 = vmul.f32 %v1448, %v1451
    %v1453 = vmul.f32 %v1446, %v1443
    %v1454 = vadd.f32 %v1452, %v1453
    %1455 = vst [vmem:[#allocation4] sm:$0xff] %v1454
    %v1456 = vld [vmem:[#allocation4] sm:$0xff]
    %v1457 = vtanh.pop %v1456
    %v1458 = vmul.f32 %v1450, %v1457
    %1459 = vst [vmem:[#allocation3] sm:$0xff] %v1458
    %v1460 = vld [vmem:[#allocation3] sm:$0xff]
    %v1461 = vld [vmem:[%s1] sm:$0xff]
    %v1462 = vadd.f32 %v1460, %v1461
    %1463 = vst [vmem:[%s5] sm:$0xff] %v1462
    // Predicated region
    $region30: #{attention_lstm_forward.1} parent=1 // pred_check
      _
    $region31: #{attention_lstm_forward.1} parent=1 // pred_check_branch
      %1465 = sbr.rel (0) target = $region33
    $region32: #{attention_lstm_forward.1} parent=1 // pred_region
      _
    $region33: #{attention_lstm_forward.1} parent=1 // pred_fallthru
      _
    // Predicated region
    $region34: #{attention_lstm_forward.1} parent=1 // pred_check
      _
    $region35: #{attention_lstm_forward.1} parent=1 // pred_check_branch
      %1467 = sbr.rel (0) target = $region37
    $region36: #{attention_lstm_forward.1} parent=1 // pred_region
      _
    $region37: #{attention_lstm_forward.1} parent=1 // pred_fallthru
      _
    %1468 = vsyncpa [#allocation6], 1
    %1469 = vsyncpa [#allocation8], 1

</llo_original>
